<compile_context>
chip_gen: v7x
topology: tpu7x:2x2x1
jax: 0.10.0
libtpu: 0.0.40
codegen_flags: <defaults>
</compile_context>

<pallas_src>
import jax
import jax.numpy as jnp
from jax.experimental import pallas as pl
from jax.experimental.pallas import tpu as pltpu

D_MODEL = 32
N_HEADS = 4                  # self.h (chosen; not set in torch __init__)
D_K = D_MODEL // N_HEADS     # self.d_k
assert N_HEADS * D_K == D_MODEL


def _make_attention_kernel(B, Lq, Lk, Lv):
    """Single-invocation kernel: fused (bias-folded) projections + attention."""
    n_q, n_k, n_v = B * Lq, B * Lk, B * Lv

    def kernel(x_ref, w_ref, o_ref):
        x = x_ref[...]                       # (n_q + n_k + n_v, D+1)
        w = w_ref[...]                       # (3, D+1, D)

        # ---- Projections: bias folded into the matmul (ones column in x,
        # bias row appended to each pre-transposed weight). 3 MXU pushes,
        # no broadcast bias adds.
        qp = jnp.dot(x[0:n_q], w[0], preferred_element_type=jnp.float32)
        kp = jnp.dot(x[n_q:n_q + n_k], w[1], preferred_element_type=jnp.float32)
        vp = jnp.dot(x[n_q + n_k:n_q + n_k + n_v], w[2],
                     preferred_element_type=jnp.float32)

        # ---- Head-major relayout: (B*L, D) -> (H*B, L, d_k), heads folded
        # into the leading batch dim (static lane slices + leading-axis
        # concat; sublane split at a multiple of 8).
        def to_heads(p, L):
            p3 = p.reshape(B, L, D_MODEL)
            return jnp.concatenate(
                [p3[:, :, h * D_K:(h + 1) * D_K] for h in range(N_HEADS)],
                axis=0)                      # (H*B, L, d_k), h-major blocks

        qh = to_heads(qp, Lq)
        kh = to_heads(kp, Lk)
        vh = to_heads(vp, Lv)

        # ---- Attention for all heads & batches: two batched einsums and one
        # softmax.  SCALE == sqrt(1) == 1 -> no per-element divide by scale.
        s = jnp.einsum('bqd,bkd->bqk', qh, kh,
                       preferred_element_type=jnp.float32)   # (H*B, Lq, Lk)
        s = s - jnp.max(s, axis=-1, keepdims=True)
        e = jnp.exp(s)
        p = e / jnp.sum(e, axis=-1, keepdims=True)            # exact softmax
        out = jnp.einsum('bqk,bkd->bqd', p, vh,
                         preferred_element_type=jnp.float32)  # (H*B, Lq, d_k)

        # ---- Un-fold heads back onto lanes (== transpose(1,2).view(...)),
        # store one contiguous (B*Lq, D) block.
        o = jnp.concatenate(
            [out[h * B:(h + 1) * B] for h in range(N_HEADS)], axis=-1)
        o_ref[...] = o.reshape(B * Lq, D_MODEL)

    return kernel


def attention_pallas(q, k, v, wq, bq, wk, bk, wv, bv):
    B, Lq, D = q.shape
    Bk, Lk, _ = k.shape
    Bv, Lv, _ = v.shape
    assert D == D_MODEL and B == Bk == Bv and Lk == Lv

    # Host-side packing (free, row-major):
    #  * activations: q/k/v rows concatenated + a ones column (bias folding),
    #  * weights: pre-transposed nn.Linear weights with the bias appended as
    #    an extra contraction row, stacked (3, D+1, D).
    # -> 2 HBM->VMEM DMAs instead of 9.
    def aug(x, L):
        x2 = x.reshape(B * L, D)
        return jnp.concatenate([x2, jnp.ones((B * L, 1), x2.dtype)], axis=1)

    x_pack = jnp.concatenate([aug(q, Lq), aug(k, Lk), aug(v, Lv)], axis=0)
    pack_w = lambda w, b: jnp.concatenate([w.T, b[None, :]], axis=0)  # (D+1, D)
    w_pack = jnp.stack([pack_w(wq, bq), pack_w(wk, bk), pack_w(wv, bv)])

    vmem = lambda: pl.BlockSpec(memory_space=pltpu.MemorySpace.VMEM)

    out2 = pl.pallas_call(
        _make_attention_kernel(B, Lq, Lk, Lv),
        out_shape=jax.ShapeDtypeStruct((B * Lq, D_MODEL), jnp.float32),
        in_specs=[vmem(), vmem()],
        out_specs=vmem(),
    )(x_pack, w_pack)
    return out2.reshape(B, Lq, D_MODEL)


def attention_ref(q, k, v, wq, bq, wk, bk, wv, bv):
    """Pure-JAX reference mirroring the torch forward (eval mode, mask=None)."""
    B, Lq, D = q.shape
    qp = (q @ wq.T + bq).reshape(B, Lq, N_HEADS, D_K).transpose(0, 2, 1, 3)
    kp = (k @ wk.T + bk).reshape(B, k.shape[1], N_HEADS, D_K).transpose(0, 2, 3, 1)
    vp = (v @ wv.T + bv).reshape(B, v.shape[1], N_HEADS, D_K).transpose(0, 2, 1, 3)
    s = jnp.matmul(qp, kp)                 # scale == 1.0
    attn = jax.nn.softmax(s, axis=-1)
    out = jnp.matmul(attn, vp).transpose(0, 2, 1, 3).reshape(B, Lq, D)
    return out


if __name__ == "__main__":
    key = jax.random.PRNGKey(0)
    kq, kk, kv, kwq, kbq, kwk, kbk, kwv, kbv = jax.random.split(key, 9)

    B, L = 2, 8
    q = jax.random.normal(kq, (B, L, D_MODEL), dtype=jnp.float32)
    k = jax.random.normal(kk, (B, L, D_MODEL), dtype=jnp.float32)
    v = jax.random.normal(kv, (B, L, D_MODEL), dtype=jnp.float32)

    bound = 1.0 / (D_MODEL ** 0.5)
    init_w = lambda kk_: jax.random.uniform(kk_, (D_MODEL, D_MODEL),
                                            minval=-bound, maxval=bound,
                                            dtype=jnp.float32)
    init_b = lambda kk_: jax.random.uniform(kk_, (D_MODEL,),
                                            minval=-bound, maxval=bound,
                                            dtype=jnp.float32)
    wq, bq = init_w(kwq), init_b(kbq)
    wk, bk = init_w(kwk), init_b(kbk)
    wv, bv = init_w(kwv), init_b(kbv)

    out = jax.jit(attention_pallas)(q, k, v, wq, bq, wk, bk, wv, bv)
    out = jax.block_until_ready(out)

    ref = attention_ref(q, k, v, wq, bq, wk, bk, wv, bv)
    assert out.shape == (B, L, D_MODEL)
    # Softmax is exact again (no approx reciprocal); remaining tolerance only
    # covers MXU-vs-XLA f32 matmul pass-precision differences.
    assert jnp.allclose(out, ref, atol=1e-3, rtol=1e-3), "mismatch vs reference"

    print("KERNEL_OK")
</pallas_src>

<mosaic_0001>
module attributes {stable_mosaic.version = 11 : i64} {
  func.func @kernel(%arg0: memref<48x33xf32, #tpu.memory_space<vmem>>, %arg1: memref<3x33x32xf32, #tpu.memory_space<vmem>>, %arg2: memref<16x32xf32, #tpu.memory_space<vmem>>) attributes {dimension_semantics = [], scalar_prefetch = 0 : i64, scratch_operands = 0 : i64, tpu.core_type = #tpu.core_type<tc>} {
    %c0 = arith.constant 0 : index
    %c0_0 = arith.constant 0 : index
    %0 = vector.load %arg0[%c0, %c0_0] : memref<48x33xf32, #tpu.memory_space<vmem>>, vector<48x33xf32>
    %c0_1 = arith.constant 0 : index
    %c0_2 = arith.constant 0 : index
    %c0_3 = arith.constant 0 : index
    %1 = vector.load %arg1[%c0_1, %c0_2, %c0_3] : memref<3x33x32xf32, #tpu.memory_space<vmem>>, vector<3x33x32xf32>
    %2 = vector.extract_strided_slice %0 {offsets = [0, 0], sizes = [16, 33], strides = [1, 1]} : vector<48x33xf32> to vector<16x33xf32>
    %3 = vector.extract_strided_slice %1 {offsets = [0, 0, 0], sizes = [1, 33, 32], strides = [1, 1, 1]} : vector<3x33x32xf32> to vector<1x33x32xf32>
    %4 = vector.shape_cast %3 : vector<1x33x32xf32> to vector<33x32xf32>
    %cst = arith.constant dense<0.000000e+00> : vector<16x32xf32>
    %5 = tpu.matmul %2, %4, %cst {dimension_numbers = #tpu.dot_dimension_numbers<[1], [0], [0], [1], [0, 0, 1, 1], [], []>} : vector<16x33xf32>, vector<33x32xf32>, vector<16x32xf32> -> vector<16x32xf32>
    %6 = vector.extract_strided_slice %0 {offsets = [16, 0], sizes = [16, 33], strides = [1, 1]} : vector<48x33xf32> to vector<16x33xf32>
    %7 = vector.extract_strided_slice %1 {offsets = [1, 0, 0], sizes = [1, 33, 32], strides = [1, 1, 1]} : vector<3x33x32xf32> to vector<1x33x32xf32>
    %8 = vector.shape_cast %7 : vector<1x33x32xf32> to vector<33x32xf32>
    %cst_4 = arith.constant dense<0.000000e+00> : vector<16x32xf32>
    %9 = tpu.matmul %6, %8, %cst_4 {dimension_numbers = #tpu.dot_dimension_numbers<[1], [0], [0], [1], [0, 0, 1, 1], [], []>} : vector<16x33xf32>, vector<33x32xf32>, vector<16x32xf32> -> vector<16x32xf32>
    %10 = vector.extract_strided_slice %0 {offsets = [32, 0], sizes = [16, 33], strides = [1, 1]} : vector<48x33xf32> to vector<16x33xf32>
    %11 = vector.extract_strided_slice %1 {offsets = [2, 0, 0], sizes = [1, 33, 32], strides = [1, 1, 1]} : vector<3x33x32xf32> to vector<1x33x32xf32>
    %12 = vector.shape_cast %11 : vector<1x33x32xf32> to vector<33x32xf32>
    %cst_5 = arith.constant dense<0.000000e+00> : vector<16x32xf32>
    %13 = tpu.matmul %10, %12, %cst_5 {dimension_numbers = #tpu.dot_dimension_numbers<[1], [0], [0], [1], [0, 0, 1, 1], [], []>} : vector<16x33xf32>, vector<33x32xf32>, vector<16x32xf32> -> vector<16x32xf32>
    %14 = vector.shape_cast %5 : vector<16x32xf32> to vector<2x8x32xf32>
    %15 = vector.extract_strided_slice %14 {offsets = [0, 0, 0], sizes = [2, 8, 8], strides = [1, 1, 1]} : vector<2x8x32xf32> to vector<2x8x8xf32>
    %16 = vector.extract_strided_slice %14 {offsets = [0, 0, 8], sizes = [2, 8, 8], strides = [1, 1, 1]} : vector<2x8x32xf32> to vector<2x8x8xf32>
    %17 = vector.extract_strided_slice %14 {offsets = [0, 0, 16], sizes = [2, 8, 8], strides = [1, 1, 1]} : vector<2x8x32xf32> to vector<2x8x8xf32>
    %18 = vector.extract_strided_slice %14 {offsets = [0, 0, 24], sizes = [2, 8, 8], strides = [1, 1, 1]} : vector<2x8x32xf32> to vector<2x8x8xf32>
    %19 = tpu.concatenate %15, %16, %17, %18 in 0 : vector<2x8x8xf32>, vector<2x8x8xf32>, vector<2x8x8xf32>, vector<2x8x8xf32> -> vector<8x8x8xf32>
    %20 = vector.shape_cast %9 : vector<16x32xf32> to vector<2x8x32xf32>
    %21 = vector.extract_strided_slice %20 {offsets = [0, 0, 0], sizes = [2, 8, 8], strides = [1, 1, 1]} : vector<2x8x32xf32> to vector<2x8x8xf32>
    %22 = vector.extract_strided_slice %20 {offsets = [0, 0, 8], sizes = [2, 8, 8], strides = [1, 1, 1]} : vector<2x8x32xf32> to vector<2x8x8xf32>
    %23 = vector.extract_strided_slice %20 {offsets = [0, 0, 16], sizes = [2, 8, 8], strides = [1, 1, 1]} : vector<2x8x32xf32> to vector<2x8x8xf32>
    %24 = vector.extract_strided_slice %20 {offsets = [0, 0, 24], sizes = [2, 8, 8], strides = [1, 1, 1]} : vector<2x8x32xf32> to vector<2x8x8xf32>
    %25 = tpu.concatenate %21, %22, %23, %24 in 0 : vector<2x8x8xf32>, vector<2x8x8xf32>, vector<2x8x8xf32>, vector<2x8x8xf32> -> vector<8x8x8xf32>
    %26 = vector.shape_cast %13 : vector<16x32xf32> to vector<2x8x32xf32>
    %27 = vector.extract_strided_slice %26 {offsets = [0, 0, 0], sizes = [2, 8, 8], strides = [1, 1, 1]} : vector<2x8x32xf32> to vector<2x8x8xf32>
    %28 = vector.extract_strided_slice %26 {offsets = [0, 0, 8], sizes = [2, 8, 8], strides = [1, 1, 1]} : vector<2x8x32xf32> to vector<2x8x8xf32>
    %29 = vector.extract_strided_slice %26 {offsets = [0, 0, 16], sizes = [2, 8, 8], strides = [1, 1, 1]} : vector<2x8x32xf32> to vector<2x8x8xf32>
    %30 = vector.extract_strided_slice %26 {offsets = [0, 0, 24], sizes = [2, 8, 8], strides = [1, 1, 1]} : vector<2x8x32xf32> to vector<2x8x8xf32>
    %31 = tpu.concatenate %27, %28, %29, %30 in 0 : vector<2x8x8xf32>, vector<2x8x8xf32>, vector<2x8x8xf32>, vector<2x8x8xf32> -> vector<8x8x8xf32>
    "tpu.trace_start"() <{level = 10 : i32, message = "bqd,bkd->bqk"}> : () -> ()
    %cst_6 = arith.constant dense<0.000000e+00> : vector<8x8x8xf32>
    %32 = tpu.matmul %19, %25, %cst_6 {dimension_numbers = #tpu.dot_dimension_numbers<[2], [2], [1], [1], [0, 0, 0, 1, 1, 1], [0], [0]>} : vector<8x8x8xf32>, vector<8x8x8xf32>, vector<8x8x8xf32> -> vector<8x8x8xf32>
    "tpu.trace_stop"() : () -> ()
    %cst_7 = arith.constant dense<0xFF800000> : vector<8x8xf32>
    %33 = vector.multi_reduction <maximumf>, %32, %cst_7 [2] : vector<8x8x8xf32> to vector<8x8xf32>
    %34 = vector.shape_cast %33 : vector<8x8xf32> to vector<8x8x1xf32>
    %35 = vector.broadcast %34 : vector<8x8x1xf32> to vector<8x8x8xf32>
    %36 = arith.subf %32, %35 : vector<8x8x8xf32>
    %37 = math.exp %36 : vector<8x8x8xf32>
    %cst_8 = arith.constant dense<0.000000e+00> : vector<8x8xf32>
    %38 = vector.multi_reduction <add>, %37, %cst_8 [2] : vector<8x8x8xf32> to vector<8x8xf32>
    %39 = vector.shape_cast %38 : vector<8x8xf32> to vector<8x8x1xf32>
    %40 = vector.broadcast %39 : vector<8x8x1xf32> to vector<8x8x8xf32>
    %41 = arith.divf %37, %40 : vector<8x8x8xf32>
    "tpu.trace_start"() <{level = 10 : i32, message = "bqk,bkd->bqd"}> : () -> ()
    %cst_9 = arith.constant dense<0.000000e+00> : vector<8x8x8xf32>
    %42 = tpu.matmul %41, %31, %cst_9 {dimension_numbers = #tpu.dot_dimension_numbers<[2], [1], [1], [2], [0, 0, 0, 1, 1, 2], [0], [0]>} : vector<8x8x8xf32>, vector<8x8x8xf32>, vector<8x8x8xf32> -> vector<8x8x8xf32>
    "tpu.trace_stop"() : () -> ()
    %43 = vector.extract_strided_slice %42 {offsets = [0, 0, 0], sizes = [2, 8, 8], strides = [1, 1, 1]} : vector<8x8x8xf32> to vector<2x8x8xf32>
    %44 = vector.extract_strided_slice %42 {offsets = [2, 0, 0], sizes = [2, 8, 8], strides = [1, 1, 1]} : vector<8x8x8xf32> to vector<2x8x8xf32>
    %45 = vector.extract_strided_slice %42 {offsets = [4, 0, 0], sizes = [2, 8, 8], strides = [1, 1, 1]} : vector<8x8x8xf32> to vector<2x8x8xf32>
    %46 = vector.extract_strided_slice %42 {offsets = [6, 0, 0], sizes = [2, 8, 8], strides = [1, 1, 1]} : vector<8x8x8xf32> to vector<2x8x8xf32>
    %47 = tpu.concatenate %43, %44, %45, %46 in 2 : vector<2x8x8xf32>, vector<2x8x8xf32>, vector<2x8x8xf32>, vector<2x8x8xf32> -> vector<2x8x32xf32>
    %48 = vector.shape_cast %47 : vector<2x8x32xf32> to vector<16x32xf32>
    %c0_10 = arith.constant 0 : index
    %c0_11 = arith.constant 0 : index
    %49 = vector.load %arg2[%c0_10, %c0_11] : memref<16x32xf32, #tpu.memory_space<vmem>>, vector<16x32xf32>
    tpu.vector_store %arg2[%c0_10, %c0_11], %48 {strides = array<i32>} : memref<16x32xf32, #tpu.memory_space<vmem>>, vector<16x32xf32>,
    return
  }
}

</mosaic_0001>

<llo_original>
// kernel: attention_pallas.1
$region0: #{attention_pallas.1}
  #allocation0 [shape = 'u32[]', space=smem, size = 0x4, offset = 0x4, fixed_abs, tag = 'smem constant byte address 0x4 - core index']
  #allocation1 [shape = 'u32[144,128]{1,0:T(1,128)}', space=vmem, size = 0x12000, scoped, tag = 'internal scratch']
  %s0 = inlined_call_operand.vmem [shape: f32[48,33], index: 0, kind: input, shape index: {}]
  %s1 = inlined_call_operand.vmem [shape: f32[3,33,32], index: 1, kind: input, shape index: {}]
  %s2 = inlined_call_operand.hbm [shape: f32[16,32], index: 2, kind: output, shape index: {}]
  %s3 = sld [smem:[#allocation0]]
  $region18: #{attention_pallas.1} parent=0
    _
  %s5 = ssub.s32 1, %s3
  %s6 = scalar_select 0, %s5, %s3
  $region1: #{attention_pallas.1} parent=0
    #allocation2 [shape = 'u8[8192]{0}', space=vmem, size = 0x2000, scoped, tag = 'output window, operand 0, single buffered']
    #allocation3 [shape = 's32[1]{0}', space=sflag, size = 0x4, scoped, tag = 'scoped memory for attention_pallas.1']
    %7 = vsyncpa [#allocation3], 0
    // Predicated region
    $region2: #{attention_pallas.1} parent=1 // pred_check
      _
    $region3: #{attention_pallas.1} parent=1 // pred_check_branch
      %9 = sbr.rel (0) target = $region5
    $region4: #{attention_pallas.1} parent=1 // pred_region
      _
    $region5: #{attention_pallas.1} parent=1 // pred_fallthru
      _
    // Predicated region
    $region6: #{attention_pallas.1} parent=1 // pred_check
      _
    $region7: #{attention_pallas.1} parent=1 // pred_check_branch
      %11 = sbr.rel (0) target = $region9
    $region8: #{attention_pallas.1} parent=1 // pred_region
      _
    $region9: #{attention_pallas.1} parent=1 // pred_fallthru
      _
    %v12 = vld [vmem:[%s0] sm:$0xff]
    %v13 = vld [vmem:[%s0 + $0x8] sm:$0xff]
    %v14 = vld [vmem:[%s0 + $0x10] sm:$0xff]
    %v15 = vld [vmem:[%s0 + $0x18] sm:$0xff]
    %v16 = vld [vmem:[%s0 + $0x20] sm:$0xff]
    %v17 = vld [vmem:[%s0 + $0x28] sm:$0xff]
    %v18 = vld [vmem:[%s1] sm:$0xff]
    %v19 = vld [vmem:[%s1 + $0x8] sm:$0xff]
    %v20 = vld [vmem:[%s1 + $0x10] sm:$0xff]
    %v21 = vld [vmem:[%s1 + $0x18] sm:$0xff]
    %v22 = vld [vmem:[%s1 + $0x20] sm:$0x1]
    %v23 = vld [vmem:[%s1 + $0x28] sm:$0xff]
    %v24 = vld [vmem:[%s1 + $0x30] sm:$0xff]
    %v25 = vld [vmem:[%s1 + $0x38] sm:$0xff]
    %v26 = vld [vmem:[%s1 + $0x40] sm:$0xff]
    %v27 = vld [vmem:[%s1 + $0x48] sm:$0x1]
    %v28 = vld [vmem:[%s1 + $0x50] sm:$0xff]
    %v29 = vld [vmem:[%s1 + $0x58] sm:$0xff]
    %v30 = vld [vmem:[%s1 + $0x60] sm:$0xff]
    %v31 = vld [vmem:[%s1 + $0x68] sm:$0xff]
    %v32 = vld [vmem:[%s1 + $0x70] sm:$0x1]
    %vm33 = vcmask 269312
    %v35 = vsel %vm33, %v12, 0
    %v38 = vsel %vm33, %v13, 0
    %vm40 = vcmask 1040384
    %v42 = vsel %vm40, %v22, 0
    %44 = vmatprep.subr.mxu0 0.0
    %45 = vmatpush1.msra.mxu0 %v18
    %46 = vmatprep.subr.mxu0 0.0
    %47 = vmatpush1.msra.mxu0 %v19
    %48 = vmatprep.subr.mxu0 0.0
    %49 = vmatpush1.msra.mxu0 %v20
    %50 = vmatprep.subr.mxu0 0.0
    %51 = vmatpush1.msra.mxu0 %v21
    %52 = vmatprep.subr.mxu0 0.0
    %53 = vmatpush1.msra.mxu0 %v42
    %54 = vmatprep.subr.mxu0 0.0
    %55 = vmatpush1.msra.mxu0 0.0
    %56 = vmatprep.subr.mxu0 0.0
    %57 = vmatpush1.msra.mxu0 0.0
    %58 = vmatprep.subr.mxu0 0.0
    %59 = vmatpush1.msra.mxu0 0.0
    %60 = vmatprep.subr.mxu0 0.0
    %61 = vmatpush1.msra.mxu0 0.0
    %62 = vmatprep.subr.mxu0 0.0
    %63 = vmatpush1.msra.mxu0 0.0
    %64 = vmatprep.subr.mxu0 0.0
    %65 = vmatpush1.msra.mxu0 0.0
    %66 = vmatprep.subr.mxu0 0.0
    %67 = vmatpush1.msra.mxu0 0.0
    %68 = vmatprep.subr.mxu0 0.0
    %69 = vmatpush1.msra.mxu0 0.0
    %70 = vmatprep.subr.mxu0 0.0
    %71 = vmatpush1.msra.mxu0 0.0
    %72 = vmatprep.subr.mxu0 0.0
    %73 = vmatpush1.msra.mxu0 0.0
    %74 = vmatprep.subr.mxu0 0.0
    %75 = vmatpush1.msra.mxu0 0.0
    %76 = vmatprep.subr.mxu0 0.0
    %77 = vmatpush1.msra.mxu0 0.0
    %78 = vmatprep.subr.mxu0 0.0
    %79 = vmatpush1.msra.mxu0 0.0
    %80 = vmatprep.subr.mxu0 0.0
    %81 = vmatpush1.msra.mxu0 0.0
    %82 = vmatprep.subr.mxu0 0.0
    %83 = vmatpush1.msra.mxu0 0.0
    %84 = vmatprep.subr.mxu0 0.0
    %85 = vmatpush1.msra.mxu0 0.0
    %86 = vmatprep.subr.mxu0 0.0
    %87 = vmatpush1.msra.mxu0 0.0
    %88 = vmatprep.subr.mxu0 0.0
    %89 = vmatpush1.msra.mxu0 0.0
    %90 = vmatprep.subr.mxu0 0.0
    %91 = vmatpush1.msra.mxu0 0.0
    %92 = vmatprep.subr.mxu0 0.0
    %93 = vmatpush1.msra.mxu0 0.0
    %94 = vmatprep.subr.mxu0 0.0
    %95 = vmatpush1.msra.mxu0 0.0
    %96 = vmatprep.subr.mxu0 0.0
    %97 = vmatpush1.msra.mxu0 0.0
    %98 = vmatprep.subr.mxu0 0.0
    %99 = vmatpush1.msra.mxu0 0.0
    %100 = vmatprep.subr.mxu0 0.0
    %101 = vmatpush1.msra.mxu0 0.0
    %102 = vmatprep.subr.mxu0 0.0
    %103 = vmatpush1.msra.mxu0 0.0
    %104 = vmatprep.subr.mxu0 0.0
    %105 = vmatpush1.msra.mxu0 0.0
    %106 = vmatprep.subr.mxu0 0.0
    %107 = vmatpush1.msra.mxu0 0.0
    %108 = vmatprep.mubr.f32.mxu0 0.0
    %109 = vmatmul.mubr.f32.gmra.mrb[0].mxu0 %v35
    %v110 = vpop.f32.mrb[0].mxu0
    %v111 = vadd.f32 0.0, %v110
    %v112 = vpop.f32.mrb[0].mxu0
    %113 = vmatprep.mubr.f32.mxu0 0.0
    %114 = vmatmul.mubr.f32.gmra.mrb[0].mxu0 %v38
    %v115 = vpop.f32.mrb[0].mxu0
    %v116 = vadd.f32 0.0, %v115
    %v117 = vpop.f32.mrb[0].mxu0
    %118 = vdwg.mxu0
    %v120 = vsel %vm33, %v14, 0
    %v123 = vsel %vm33, %v15, 0
    %v126 = vsel %vm40, %v27, 0
    %128 = vmatprep.subr.mxu0 0.0
    %129 = vmatpush1.msra.mxu0 %v23
    %130 = vmatprep.subr.mxu0 0.0
    %131 = vmatpush1.msra.mxu0 %v24
    %132 = vmatprep.subr.mxu0 0.0
    %133 = vmatpush1.msra.mxu0 %v25
    %134 = vmatprep.subr.mxu0 0.0
    %135 = vmatpush1.msra.mxu0 %v26
    %136 = vmatprep.subr.mxu0 0.0
    %137 = vmatpush1.msra.mxu0 %v126
    %138 = vmatprep.subr.mxu0 0.0
    %139 = vmatpush1.msra.mxu0 0.0
    %140 = vmatprep.subr.mxu0 0.0
    %141 = vmatpush1.msra.mxu0 0.0
    %142 = vmatprep.subr.mxu0 0.0
    %143 = vmatpush1.msra.mxu0 0.0
    %144 = vmatprep.subr.mxu0 0.0
    %145 = vmatpush1.msra.mxu0 0.0
    %146 = vmatprep.subr.mxu0 0.0
    %147 = vmatpush1.msra.mxu0 0.0
    %148 = vmatprep.subr.mxu0 0.0
    %149 = vmatpush1.msra.mxu0 0.0
    %150 = vmatprep.subr.mxu0 0.0
    %151 = vmatpush1.msra.mxu0 0.0
    %152 = vmatprep.subr.mxu0 0.0
    %153 = vmatpush1.msra.mxu0 0.0
    %154 = vmatprep.subr.mxu0 0.0
    %155 = vmatpush1.msra.mxu0 0.0
    %156 = vmatprep.subr.mxu0 0.0
    %157 = vmatpush1.msra.mxu0 0.0
    %158 = vmatprep.subr.mxu0 0.0
    %159 = vmatpush1.msra.mxu0 0.0
    %160 = vmatprep.subr.mxu0 0.0
    %161 = vmatpush1.msra.mxu0 0.0
    %162 = vmatprep.subr.mxu0 0.0
    %163 = vmatpush1.msra.mxu0 0.0
    %164 = vmatprep.subr.mxu0 0.0
    %165 = vmatpush1.msra.mxu0 0.0
    %166 = vmatprep.subr.mxu0 0.0
    %167 = vmatpush1.msra.mxu0 0.0
    %168 = vmatprep.subr.mxu0 0.0
    %169 = vmatpush1.msra.mxu0 0.0
    %170 = vmatprep.subr.mxu0 0.0
    %171 = vmatpush1.msra.mxu0 0.0
    %172 = vmatprep.subr.mxu0 0.0
    %173 = vmatpush1.msra.mxu0 0.0
    %174 = vmatprep.subr.mxu0 0.0
    %175 = vmatpush1.msra.mxu0 0.0
    %176 = vmatprep.subr.mxu0 0.0
    %177 = vmatpush1.msra.mxu0 0.0
    %178 = vmatprep.subr.mxu0 0.0
    %179 = vmatpush1.msra.mxu0 0.0
    %180 = vmatprep.subr.mxu0 0.0
    %181 = vmatpush1.msra.mxu0 0.0
    %182 = vmatprep.subr.mxu0 0.0
    %183 = vmatpush1.msra.mxu0 0.0
    %184 = vmatprep.subr.mxu0 0.0
    %185 = vmatpush1.msra.mxu0 0.0
    %186 = vmatprep.subr.mxu0 0.0
    %187 = vmatpush1.msra.mxu0 0.0
    %188 = vmatprep.subr.mxu0 0.0
    %189 = vmatpush1.msra.mxu0 0.0
    %190 = vmatprep.subr.mxu0 0.0
    %191 = vmatpush1.msra.mxu0 0.0
    %192 = vmatprep.mubr.f32.mxu0 0.0
    %193 = vmatmul.mubr.f32.gmra.mrb[0].mxu0 %v120
    %v194 = vpop.f32.mrb[0].mxu0
    %v195 = vadd.f32 0.0, %v194
    %v196 = vpop.f32.mrb[0].mxu0
    %197 = vmatprep.mubr.f32.mxu0 0.0
    %198 = vmatmul.mubr.f32.gmra.mrb[0].mxu0 %v123
    %v199 = vpop.f32.mrb[0].mxu0
    %v200 = vadd.f32 0.0, %v199
    %v201 = vpop.f32.mrb[0].mxu0
    %202 = vdwg.mxu0
    %v204 = vsel %vm33, %v16, 0
    %v207 = vsel %vm33, %v17, 0
    %v210 = vsel %vm40, %v32, 0
    %212 = vmatprep.subr.mxu0 0.0
    %213 = vmatpush1.msra.mxu0 %v28
    %214 = vmatprep.subr.mxu0 0.0
    %215 = vmatpush1.msra.mxu0 %v29
    %216 = vmatprep.subr.mxu0 0.0
    %217 = vmatpush1.msra.mxu0 %v30
    %218 = vmatprep.subr.mxu0 0.0
    %219 = vmatpush1.msra.mxu0 %v31
    %220 = vmatprep.subr.mxu0 0.0
    %221 = vmatpush1.msra.mxu0 %v210
    %222 = vmatprep.subr.mxu0 0.0
    %223 = vmatpush1.msra.mxu0 0.0
    %224 = vmatprep.subr.mxu0 0.0
    %225 = vmatpush1.msra.mxu0 0.0
    %226 = vmatprep.subr.mxu0 0.0
    %227 = vmatpush1.msra.mxu0 0.0
    %228 = vmatprep.subr.mxu0 0.0
    %229 = vmatpush1.msra.mxu0 0.0
    %230 = vmatprep.subr.mxu0 0.0
    %231 = vmatpush1.msra.mxu0 0.0
    %232 = vmatprep.subr.mxu0 0.0
    %233 = vmatpush1.msra.mxu0 0.0
    %234 = vmatprep.subr.mxu0 0.0
    %235 = vmatpush1.msra.mxu0 0.0
    %236 = vmatprep.subr.mxu0 0.0
    %237 = vmatpush1.msra.mxu0 0.0
    %238 = vmatprep.subr.mxu0 0.0
    %239 = vmatpush1.msra.mxu0 0.0
    %240 = vmatprep.subr.mxu0 0.0
    %241 = vmatpush1.msra.mxu0 0.0
    %242 = vmatprep.subr.mxu0 0.0
    %243 = vmatpush1.msra.mxu0 0.0
    %244 = vmatprep.subr.mxu0 0.0
    %245 = vmatpush1.msra.mxu0 0.0
    %246 = vmatprep.subr.mxu0 0.0
    %247 = vmatpush1.msra.mxu0 0.0
    %248 = vmatprep.subr.mxu0 0.0
    %249 = vmatpush1.msra.mxu0 0.0
    %250 = vmatprep.subr.mxu0 0.0
    %251 = vmatpush1.msra.mxu0 0.0
    %252 = vmatprep.subr.mxu0 0.0
    %253 = vmatpush1.msra.mxu0 0.0
    %254 = vmatprep.subr.mxu0 0.0
    %255 = vmatpush1.msra.mxu0 0.0
    %256 = vmatprep.subr.mxu0 0.0
    %257 = vmatpush1.msra.mxu0 0.0
    %258 = vmatprep.subr.mxu0 0.0
    %259 = vmatpush1.msra.mxu0 0.0
    %260 = vmatprep.subr.mxu0 0.0
    %261 = vmatpush1.msra.mxu0 0.0
    %262 = vmatprep.subr.mxu0 0.0
    %263 = vmatpush1.msra.mxu0 0.0
    %264 = vmatprep.subr.mxu0 0.0
    %265 = vmatpush1.msra.mxu0 0.0
    %266 = vmatprep.subr.mxu0 0.0
    %267 = vmatpush1.msra.mxu0 0.0
    %268 = vmatprep.subr.mxu0 0.0
    %269 = vmatpush1.msra.mxu0 0.0
    %270 = vmatprep.subr.mxu0 0.0
    %271 = vmatpush1.msra.mxu0 0.0
    %272 = vmatprep.subr.mxu0 0.0
    %273 = vmatpush1.msra.mxu0 0.0
    %274 = vmatprep.subr.mxu0 0.0
    %275 = vmatpush1.msra.mxu0 0.0
    %276 = vmatprep.mubr.f32.mxu0 0.0
    %277 = vmatmul.mubr.f32.gmra.mrb[0].mxu0 %v204
    %v278 = vpop.f32.mrb[0].mxu0
    %v279 = vadd.f32 0.0, %v278
    %v280 = vpop.f32.mrb[0].mxu0
    %281 = vmatprep.mubr.f32.mxu0 0.0
    %282 = vmatmul.mubr.f32.gmra.mrb[0].mxu0 %v207
    %v283 = vpop.f32.mrb[0].mxu0
    %v284 = vadd.f32 0.0, %v283
    %v285 = vpop.f32.mrb[0].mxu0
    %286 = vdwg.mxu0
    %289 = vrot.lane.b32.xlu0 %v111, 120
    %v290 = vpop.permute.xlu0 %289
    %291 = vrot.lane.b32.xlu0 %v116, 120
    %v292 = vpop.permute.xlu0 %291
    %293 = vrot.lane.b32.xlu0 %v111, 112
    %v294 = vpop.permute.xlu0 %293
    %295 = vrot.lane.b32.xlu0 %v116, 112
    %v296 = vpop.permute.xlu0 %295
    %297 = vrot.lane.b32.xlu0 %v111, 104
    %v298 = vpop.permute.xlu0 %297
    %299 = vrot.lane.b32.xlu0 %v116, 104
    %v300 = vpop.permute.xlu0 %299
    %303 = vrot.lane.b32.xlu0 %v195, 120
    %v304 = vpop.permute.xlu0 %303
    %305 = vrot.lane.b32.xlu0 %v200, 120
    %v306 = vpop.permute.xlu0 %305
    %307 = vrot.lane.b32.xlu0 %v195, 112
    %v308 = vpop.permute.xlu0 %307
    %309 = vrot.lane.b32.xlu0 %v200, 112
    %v310 = vpop.permute.xlu0 %309
    %311 = vrot.lane.b32.xlu0 %v195, 104
    %v312 = vpop.permute.xlu0 %311
    %313 = vrot.lane.b32.xlu0 %v200, 104
    %v314 = vpop.permute.xlu0 %313
    %317 = vrot.lane.b32.xlu0 %v279, 120
    %v318 = vpop.permute.xlu0 %317
    %319 = vrot.lane.b32.xlu0 %v284, 120
    %v320 = vpop.permute.xlu0 %319
    %323 = vrot.lane.b32.xlu0 %v279, 112
    %v324 = vpop.permute.xlu0 %323
    %325 = vrot.lane.b32.xlu0 %v284, 112
    %v326 = vpop.permute.xlu0 %325
    %329 = vrot.lane.b32.xlu0 %v279, 104
    %v330 = vpop.permute.xlu0 %329
    %331 = vrot.lane.b32.xlu0 %v284, 104
    %v332 = vpop.permute.xlu0 %331
    %vm335 = vcmask 64512
    %v336 = vsel %vm335, %v111, 0
    %v338 = vsel %vm335, %v195, 0
    %340 = vmatprep.subr.mxu0 0.0
    %341 = vmatpush1.xpose.msra.mxu0 %v338
    %342 = vmatprep.subr.mxu0 0.0
    %343 = vmatpush1.xpose.msra.mxu0 0.0
    %344 = vmatprep.subr.mxu0 0.0
    %345 = vmatpush1.xpose.msra.mxu0 0.0
    %346 = vmatprep.subr.mxu0 0.0
    %347 = vmatpush1.xpose.msra.mxu0 0.0
    %348 = vmatprep.subr.mxu0 0.0
    %349 = vmatpush1.xpose.msra.mxu0 0.0
    %350 = vmatprep.subr.mxu0 0.0
    %351 = vmatpush1.xpose.msra.mxu0 0.0
    %352 = vmatprep.subr.mxu0 0.0
    %353 = vmatpush1.xpose.msra.mxu0 0.0
    %354 = vmatprep.subr.mxu0 0.0
    %355 = vmatpush1.xpose.msra.mxu0 0.0
    %356 = vmatprep.subr.mxu0 0.0
    %357 = vmatpush1.xpose.msra.mxu0 0.0
    %358 = vmatprep.subr.mxu0 0.0
    %359 = vmatpush1.xpose.msra.mxu0 0.0
    %360 = vmatprep.subr.mxu0 0.0
    %361 = vmatpush1.xpose.msra.mxu0 0.0
    %362 = vmatprep.subr.mxu0 0.0
    %363 = vmatpush1.xpose.msra.mxu0 0.0
    %364 = vmatprep.subr.mxu0 0.0
    %365 = vmatpush1.xpose.msra.mxu0 0.0
    %366 = vmatprep.subr.mxu0 0.0
    %367 = vmatpush1.xpose.msra.mxu0 0.0
    %368 = vmatprep.subr.mxu0 0.0
    %369 = vmatpush1.xpose.msra.mxu0 0.0
    %370 = vmatprep.subr.mxu0 0.0
    %371 = vmatpush1.xpose.msra.mxu0 0.0
    %372 = vmatprep.subr.mxu0 0.0
    %373 = vmatpush1.xpose.msra.mxu0 0.0
    %374 = vmatprep.subr.mxu0 0.0
    %375 = vmatpush1.xpose.msra.mxu0 0.0
    %376 = vmatprep.subr.mxu0 0.0
    %377 = vmatpush1.xpose.msra.mxu0 0.0
    %378 = vmatprep.subr.mxu0 0.0
    %379 = vmatpush1.xpose.msra.mxu0 0.0
    %380 = vmatprep.subr.mxu0 0.0
    %381 = vmatpush1.xpose.msra.mxu0 0.0
    %382 = vmatprep.subr.mxu0 0.0
    %383 = vmatpush1.xpose.msra.mxu0 0.0
    %384 = vmatprep.subr.mxu0 0.0
    %385 = vmatpush1.xpose.msra.mxu0 0.0
    %386 = vmatprep.subr.mxu0 0.0
    %387 = vmatpush1.xpose.msra.mxu0 0.0
    %388 = vmatprep.subr.mxu0 0.0
    %389 = vmatpush1.xpose.msra.mxu0 0.0
    %390 = vmatprep.subr.mxu0 0.0
    %391 = vmatpush1.xpose.msra.mxu0 0.0
    %392 = vmatprep.subr.mxu0 0.0
    %393 = vmatpush1.xpose.msra.mxu0 0.0
    %394 = vmatprep.subr.mxu0 0.0
    %395 = vmatpush1.xpose.msra.mxu0 0.0
    %396 = vmatprep.subr.mxu0 0.0
    %397 = vmatpush1.xpose.msra.mxu0 0.0
    %398 = vmatprep.subr.mxu0 0.0
    %399 = vmatpush1.xpose.msra.mxu0 0.0
    %400 = vmatprep.subr.mxu0 0.0
    %401 = vmatpush1.xpose.msra.mxu0 0.0
    %402 = vmatprep.subr.mxu0 0.0
    %403 = vmatpush1.xpose.msra.mxu0 0.0
    %404 = vmatprep.mubr.f32.mxu0 0.0
    %405 = vmatmul.mubr.f32.gmra.mrb[0].mxu0 %v336
    %v406 = vpop.f32.mrb[0].mxu0
    %v407 = vadd.f32 0.0, %v406
    %v408 = vpop.f32.mrb[0].mxu0
    %409 = vdwg.mxu0
    %v410 = vsel %vm335, %v116, 0
    %v412 = vsel %vm335, %v200, 0
    %414 = vmatprep.subr.mxu0 0.0
    %415 = vmatpush1.xpose.msra.mxu0 %v412
    %416 = vmatprep.subr.mxu0 0.0
    %417 = vmatpush1.xpose.msra.mxu0 0.0
    %418 = vmatprep.subr.mxu0 0.0
    %419 = vmatpush1.xpose.msra.mxu0 0.0
    %420 = vmatprep.subr.mxu0 0.0
    %421 = vmatpush1.xpose.msra.mxu0 0.0
    %422 = vmatprep.subr.mxu0 0.0
    %423 = vmatpush1.xpose.msra.mxu0 0.0
    %424 = vmatprep.subr.mxu0 0.0
    %425 = vmatpush1.xpose.msra.mxu0 0.0
    %426 = vmatprep.subr.mxu0 0.0
    %427 = vmatpush1.xpose.msra.mxu0 0.0
    %428 = vmatprep.subr.mxu0 0.0
    %429 = vmatpush1.xpose.msra.mxu0 0.0
    %430 = vmatprep.subr.mxu0 0.0
    %431 = vmatpush1.xpose.msra.mxu0 0.0
    %432 = vmatprep.subr.mxu0 0.0
    %433 = vmatpush1.xpose.msra.mxu0 0.0
    %434 = vmatprep.subr.mxu0 0.0
    %435 = vmatpush1.xpose.msra.mxu0 0.0
    %436 = vmatprep.subr.mxu0 0.0
    %437 = vmatpush1.xpose.msra.mxu0 0.0
    %438 = vmatprep.subr.mxu0 0.0
    %439 = vmatpush1.xpose.msra.mxu0 0.0
    %440 = vmatprep.subr.mxu0 0.0
    %441 = vmatpush1.xpose.msra.mxu0 0.0
    %442 = vmatprep.subr.mxu0 0.0
    %443 = vmatpush1.xpose.msra.mxu0 0.0
    %444 = vmatprep.subr.mxu0 0.0
    %445 = vmatpush1.xpose.msra.mxu0 0.0
    %446 = vmatprep.subr.mxu0 0.0
    %447 = vmatpush1.xpose.msra.mxu0 0.0
    %448 = vmatprep.subr.mxu0 0.0
    %449 = vmatpush1.xpose.msra.mxu0 0.0
    %450 = vmatprep.subr.mxu0 0.0
    %451 = vmatpush1.xpose.msra.mxu0 0.0
    %452 = vmatprep.subr.mxu0 0.0
    %453 = vmatpush1.xpose.msra.mxu0 0.0
    %454 = vmatprep.subr.mxu0 0.0
    %455 = vmatpush1.xpose.msra.mxu0 0.0
    %456 = vmatprep.subr.mxu0 0.0
    %457 = vmatpush1.xpose.msra.mxu0 0.0
    %458 = vmatprep.subr.mxu0 0.0
    %459 = vmatpush1.xpose.msra.mxu0 0.0
    %460 = vmatprep.subr.mxu0 0.0
    %461 = vmatpush1.xpose.msra.mxu0 0.0
    %462 = vmatprep.subr.mxu0 0.0
    %463 = vmatpush1.xpose.msra.mxu0 0.0
    %464 = vmatprep.subr.mxu0 0.0
    %465 = vmatpush1.xpose.msra.mxu0 0.0
    %466 = vmatprep.subr.mxu0 0.0
    %467 = vmatpush1.xpose.msra.mxu0 0.0
    %468 = vmatprep.subr.mxu0 0.0
    %469 = vmatpush1.xpose.msra.mxu0 0.0
    %470 = vmatprep.subr.mxu0 0.0
    %471 = vmatpush1.xpose.msra.mxu0 0.0
    %472 = vmatprep.subr.mxu0 0.0
    %473 = vmatpush1.xpose.msra.mxu0 0.0
    %474 = vmatprep.subr.mxu0 0.0
    %475 = vmatpush1.xpose.msra.mxu0 0.0
    %476 = vmatprep.subr.mxu0 0.0
    %477 = vmatpush1.xpose.msra.mxu0 0.0
    %478 = vmatprep.mubr.f32.mxu0 0.0
    %479 = vmatmul.mubr.f32.gmra.mrb[0].mxu0 %v410
    %v480 = vpop.f32.mrb[0].mxu0
    %v481 = vadd.f32 0.0, %v480
    %v482 = vpop.f32.mrb[0].mxu0
    %483 = vdwg.mxu0
    %v484 = vsel %vm335, %v290, 0
    %v486 = vsel %vm335, %v304, 0
    %488 = vmatprep.subr.mxu0 0.0
    %489 = vmatpush1.xpose.msra.mxu0 %v486
    %490 = vmatprep.subr.mxu0 0.0
    %491 = vmatpush1.xpose.msra.mxu0 0.0
    %492 = vmatprep.subr.mxu0 0.0
    %493 = vmatpush1.xpose.msra.mxu0 0.0
    %494 = vmatprep.subr.mxu0 0.0
    %495 = vmatpush1.xpose.msra.mxu0 0.0
    %496 = vmatprep.subr.mxu0 0.0
    %497 = vmatpush1.xpose.msra.mxu0 0.0
    %498 = vmatprep.subr.mxu0 0.0
    %499 = vmatpush1.xpose.msra.mxu0 0.0
    %500 = vmatprep.subr.mxu0 0.0
    %501 = vmatpush1.xpose.msra.mxu0 0.0
    %502 = vmatprep.subr.mxu0 0.0
    %503 = vmatpush1.xpose.msra.mxu0 0.0
    %504 = vmatprep.subr.mxu0 0.0
    %505 = vmatpush1.xpose.msra.mxu0 0.0
    %506 = vmatprep.subr.mxu0 0.0
    %507 = vmatpush1.xpose.msra.mxu0 0.0
    %508 = vmatprep.subr.mxu0 0.0
    %509 = vmatpush1.xpose.msra.mxu0 0.0
    %510 = vmatprep.subr.mxu0 0.0
    %511 = vmatpush1.xpose.msra.mxu0 0.0
    %512 = vmatprep.subr.mxu0 0.0
    %513 = vmatpush1.xpose.msra.mxu0 0.0
    %514 = vmatprep.subr.mxu0 0.0
    %515 = vmatpush1.xpose.msra.mxu0 0.0
    %516 = vmatprep.subr.mxu0 0.0
    %517 = vmatpush1.xpose.msra.mxu0 0.0
    %518 = vmatprep.subr.mxu0 0.0
    %519 = vmatpush1.xpose.msra.mxu0 0.0
    %520 = vmatprep.subr.mxu0 0.0
    %521 = vmatpush1.xpose.msra.mxu0 0.0
    %522 = vmatprep.subr.mxu0 0.0
    %523 = vmatpush1.xpose.msra.mxu0 0.0
    %524 = vmatprep.subr.mxu0 0.0
    %525 = vmatpush1.xpose.msra.mxu0 0.0
    %526 = vmatprep.subr.mxu0 0.0
    %527 = vmatpush1.xpose.msra.mxu0 0.0
    %528 = vmatprep.subr.mxu0 0.0
    %529 = vmatpush1.xpose.msra.mxu0 0.0
    %530 = vmatprep.subr.mxu0 0.0
    %531 = vmatpush1.xpose.msra.mxu0 0.0
    %532 = vmatprep.subr.mxu0 0.0
    %533 = vmatpush1.xpose.msra.mxu0 0.0
    %534 = vmatprep.subr.mxu0 0.0
    %535 = vmatpush1.xpose.msra.mxu0 0.0
    %536 = vmatprep.subr.mxu0 0.0
    %537 = vmatpush1.xpose.msra.mxu0 0.0
    %538 = vmatprep.subr.mxu0 0.0
    %539 = vmatpush1.xpose.msra.mxu0 0.0
    %540 = vmatprep.subr.mxu0 0.0
    %541 = vmatpush1.xpose.msra.mxu0 0.0
    %542 = vmatprep.subr.mxu0 0.0
    %543 = vmatpush1.xpose.msra.mxu0 0.0
    %544 = vmatprep.subr.mxu0 0.0
    %545 = vmatpush1.xpose.msra.mxu0 0.0
    %546 = vmatprep.subr.mxu0 0.0
    %547 = vmatpush1.xpose.msra.mxu0 0.0
    %548 = vmatprep.subr.mxu0 0.0
    %549 = vmatpush1.xpose.msra.mxu0 0.0
    %550 = vmatprep.subr.mxu0 0.0
    %551 = vmatpush1.xpose.msra.mxu0 0.0
    %552 = vmatprep.mubr.f32.mxu0 0.0
    %553 = vmatmul.mubr.f32.gmra.mrb[0].mxu0 %v484
    %v554 = vpop.f32.mrb[0].mxu0
    %v555 = vadd.f32 0.0, %v554
    %v556 = vpop.f32.mrb[0].mxu0
    %557 = vdwg.mxu0
    %v558 = vsel %vm335, %v292, 0
    %v560 = vsel %vm335, %v306, 0
    %562 = vmatprep.subr.mxu0 0.0
    %563 = vmatpush1.xpose.msra.mxu0 %v560
    %564 = vmatprep.subr.mxu0 0.0
    %565 = vmatpush1.xpose.msra.mxu0 0.0
    %566 = vmatprep.subr.mxu0 0.0
    %567 = vmatpush1.xpose.msra.mxu0 0.0
    %568 = vmatprep.subr.mxu0 0.0
    %569 = vmatpush1.xpose.msra.mxu0 0.0
    %570 = vmatprep.subr.mxu0 0.0
    %571 = vmatpush1.xpose.msra.mxu0 0.0
    %572 = vmatprep.subr.mxu0 0.0
    %573 = vmatpush1.xpose.msra.mxu0 0.0
    %574 = vmatprep.subr.mxu0 0.0
    %575 = vmatpush1.xpose.msra.mxu0 0.0
    %576 = vmatprep.subr.mxu0 0.0
    %577 = vmatpush1.xpose.msra.mxu0 0.0
    %578 = vmatprep.subr.mxu0 0.0
    %579 = vmatpush1.xpose.msra.mxu0 0.0
    %580 = vmatprep.subr.mxu0 0.0
    %581 = vmatpush1.xpose.msra.mxu0 0.0
    %582 = vmatprep.subr.mxu0 0.0
    %583 = vmatpush1.xpose.msra.mxu0 0.0
    %584 = vmatprep.subr.mxu0 0.0
    %585 = vmatpush1.xpose.msra.mxu0 0.0
    %586 = vmatprep.subr.mxu0 0.0
    %587 = vmatpush1.xpose.msra.mxu0 0.0
    %588 = vmatprep.subr.mxu0 0.0
    %589 = vmatpush1.xpose.msra.mxu0 0.0
    %590 = vmatprep.subr.mxu0 0.0
    %591 = vmatpush1.xpose.msra.mxu0 0.0
    %592 = vmatprep.subr.mxu0 0.0
    %593 = vmatpush1.xpose.msra.mxu0 0.0
    %594 = vmatprep.subr.mxu0 0.0
    %595 = vmatpush1.xpose.msra.mxu0 0.0
    %596 = vmatprep.subr.mxu0 0.0
    %597 = vmatpush1.xpose.msra.mxu0 0.0
    %598 = vmatprep.subr.mxu0 0.0
    %599 = vmatpush1.xpose.msra.mxu0 0.0
    %600 = vmatprep.subr.mxu0 0.0
    %601 = vmatpush1.xpose.msra.mxu0 0.0
    %602 = vmatprep.subr.mxu0 0.0
    %603 = vmatpush1.xpose.msra.mxu0 0.0
    %604 = vmatprep.subr.mxu0 0.0
    %605 = vmatpush1.xpose.msra.mxu0 0.0
    %606 = vmatprep.subr.mxu0 0.0
    %607 = vmatpush1.xpose.msra.mxu0 0.0
    %608 = vmatprep.subr.mxu0 0.0
    %609 = vmatpush1.xpose.msra.mxu0 0.0
    %610 = vmatprep.subr.mxu0 0.0
    %611 = vmatpush1.xpose.msra.mxu0 0.0
    %612 = vmatprep.subr.mxu0 0.0
    %613 = vmatpush1.xpose.msra.mxu0 0.0
    %614 = vmatprep.subr.mxu0 0.0
    %615 = vmatpush1.xpose.msra.mxu0 0.0
    %616 = vmatprep.subr.mxu0 0.0
    %617 = vmatpush1.xpose.msra.mxu0 0.0
    %618 = vmatprep.subr.mxu0 0.0
    %619 = vmatpush1.xpose.msra.mxu0 0.0
    %620 = vmatprep.subr.mxu0 0.0
    %621 = vmatpush1.xpose.msra.mxu0 0.0
    %622 = vmatprep.subr.mxu0 0.0
    %623 = vmatpush1.xpose.msra.mxu0 0.0
    %624 = vmatprep.subr.mxu0 0.0
    %625 = vmatpush1.xpose.msra.mxu0 0.0
    %626 = vmatprep.mubr.f32.mxu0 0.0
    %627 = vmatmul.mubr.f32.gmra.mrb[0].mxu0 %v558
    %v628 = vpop.f32.mrb[0].mxu0
    %v629 = vadd.f32 0.0, %v628
    %v630 = vpop.f32.mrb[0].mxu0
    %631 = vdwg.mxu0
    %v632 = vsel %vm335, %v294, 0
    %v634 = vsel %vm335, %v308, 0
    %636 = vmatprep.subr.mxu0 0.0
    %637 = vmatpush1.xpose.msra.mxu0 %v634
    %638 = vmatprep.subr.mxu0 0.0
    %639 = vmatpush1.xpose.msra.mxu0 0.0
    %640 = vmatprep.subr.mxu0 0.0
    %641 = vmatpush1.xpose.msra.mxu0 0.0
    %642 = vmatprep.subr.mxu0 0.0
    %643 = vmatpush1.xpose.msra.mxu0 0.0
    %644 = vmatprep.subr.mxu0 0.0
    %645 = vmatpush1.xpose.msra.mxu0 0.0
    %646 = vmatprep.subr.mxu0 0.0
    %647 = vmatpush1.xpose.msra.mxu0 0.0
    %648 = vmatprep.subr.mxu0 0.0
    %649 = vmatpush1.xpose.msra.mxu0 0.0
    %650 = vmatprep.subr.mxu0 0.0
    %651 = vmatpush1.xpose.msra.mxu0 0.0
    %652 = vmatprep.subr.mxu0 0.0
    %653 = vmatpush1.xpose.msra.mxu0 0.0
    %654 = vmatprep.subr.mxu0 0.0
    %655 = vmatpush1.xpose.msra.mxu0 0.0
    %656 = vmatprep.subr.mxu0 0.0
    %657 = vmatpush1.xpose.msra.mxu0 0.0
    %658 = vmatprep.subr.mxu0 0.0
    %659 = vmatpush1.xpose.msra.mxu0 0.0
    %660 = vmatprep.subr.mxu0 0.0
    %661 = vmatpush1.xpose.msra.mxu0 0.0
    %662 = vmatprep.subr.mxu0 0.0
    %663 = vmatpush1.xpose.msra.mxu0 0.0
    %664 = vmatprep.subr.mxu0 0.0
    %665 = vmatpush1.xpose.msra.mxu0 0.0
    %666 = vmatprep.subr.mxu0 0.0
    %667 = vmatpush1.xpose.msra.mxu0 0.0
    %668 = vmatprep.subr.mxu0 0.0
    %669 = vmatpush1.xpose.msra.mxu0 0.0
    %670 = vmatprep.subr.mxu0 0.0
    %671 = vmatpush1.xpose.msra.mxu0 0.0
    %672 = vmatprep.subr.mxu0 0.0
    %673 = vmatpush1.xpose.msra.mxu0 0.0
    %674 = vmatprep.subr.mxu0 0.0
    %675 = vmatpush1.xpose.msra.mxu0 0.0
    %676 = vmatprep.subr.mxu0 0.0
    %677 = vmatpush1.xpose.msra.mxu0 0.0
    %678 = vmatprep.subr.mxu0 0.0
    %679 = vmatpush1.xpose.msra.mxu0 0.0
    %680 = vmatprep.subr.mxu0 0.0
    %681 = vmatpush1.xpose.msra.mxu0 0.0
    %682 = vmatprep.subr.mxu0 0.0
    %683 = vmatpush1.xpose.msra.mxu0 0.0
    %684 = vmatprep.subr.mxu0 0.0
    %685 = vmatpush1.xpose.msra.mxu0 0.0
    %686 = vmatprep.subr.mxu0 0.0
    %687 = vmatpush1.xpose.msra.mxu0 0.0
    %688 = vmatprep.subr.mxu0 0.0
    %689 = vmatpush1.xpose.msra.mxu0 0.0
    %690 = vmatprep.subr.mxu0 0.0
    %691 = vmatpush1.xpose.msra.mxu0 0.0
    %692 = vmatprep.subr.mxu0 0.0
    %693 = vmatpush1.xpose.msra.mxu0 0.0
    %694 = vmatprep.subr.mxu0 0.0
    %695 = vmatpush1.xpose.msra.mxu0 0.0
    %696 = vmatprep.subr.mxu0 0.0
    %697 = vmatpush1.xpose.msra.mxu0 0.0
    %698 = vmatprep.subr.mxu0 0.0
    %699 = vmatpush1.xpose.msra.mxu0 0.0
    %700 = vmatprep.mubr.f32.mxu0 0.0
    %701 = vmatmul.mubr.f32.gmra.mrb[0].mxu0 %v632
    %v702 = vpop.f32.mrb[0].mxu0
    %v703 = vadd.f32 0.0, %v702
    %v704 = vpop.f32.mrb[0].mxu0
    %705 = vdwg.mxu0
    %v706 = vsel %vm335, %v296, 0
    %v708 = vsel %vm335, %v310, 0
    %710 = vmatprep.subr.mxu0 0.0
    %711 = vmatpush1.xpose.msra.mxu0 %v708
    %712 = vmatprep.subr.mxu0 0.0
    %713 = vmatpush1.xpose.msra.mxu0 0.0
    %714 = vmatprep.subr.mxu0 0.0
    %715 = vmatpush1.xpose.msra.mxu0 0.0
    %716 = vmatprep.subr.mxu0 0.0
    %717 = vmatpush1.xpose.msra.mxu0 0.0
    %718 = vmatprep.subr.mxu0 0.0
    %719 = vmatpush1.xpose.msra.mxu0 0.0
    %720 = vmatprep.subr.mxu0 0.0
    %721 = vmatpush1.xpose.msra.mxu0 0.0
    %722 = vmatprep.subr.mxu0 0.0
    %723 = vmatpush1.xpose.msra.mxu0 0.0
    %724 = vmatprep.subr.mxu0 0.0
    %725 = vmatpush1.xpose.msra.mxu0 0.0
    %726 = vmatprep.subr.mxu0 0.0
    %727 = vmatpush1.xpose.msra.mxu0 0.0
    %728 = vmatprep.subr.mxu0 0.0
    %729 = vmatpush1.xpose.msra.mxu0 0.0
    %730 = vmatprep.subr.mxu0 0.0
    %731 = vmatpush1.xpose.msra.mxu0 0.0
    %732 = vmatprep.subr.mxu0 0.0
    %733 = vmatpush1.xpose.msra.mxu0 0.0
    %734 = vmatprep.subr.mxu0 0.0
    %735 = vmatpush1.xpose.msra.mxu0 0.0
    %736 = vmatprep.subr.mxu0 0.0
    %737 = vmatpush1.xpose.msra.mxu0 0.0
    %738 = vmatprep.subr.mxu0 0.0
    %739 = vmatpush1.xpose.msra.mxu0 0.0
    %740 = vmatprep.subr.mxu0 0.0
    %741 = vmatpush1.xpose.msra.mxu0 0.0
    %742 = vmatprep.subr.mxu0 0.0
    %743 = vmatpush1.xpose.msra.mxu0 0.0
    %744 = vmatprep.subr.mxu0 0.0
    %745 = vmatpush1.xpose.msra.mxu0 0.0
    %746 = vmatprep.subr.mxu0 0.0
    %747 = vmatpush1.xpose.msra.mxu0 0.0
    %748 = vmatprep.subr.mxu0 0.0
    %749 = vmatpush1.xpose.msra.mxu0 0.0
    %750 = vmatprep.subr.mxu0 0.0
    %751 = vmatpush1.xpose.msra.mxu0 0.0
    %752 = vmatprep.subr.mxu0 0.0
    %753 = vmatpush1.xpose.msra.mxu0 0.0
    %754 = vmatprep.subr.mxu0 0.0
    %755 = vmatpush1.xpose.msra.mxu0 0.0
    %756 = vmatprep.subr.mxu0 0.0
    %757 = vmatpush1.xpose.msra.mxu0 0.0
    %758 = vmatprep.subr.mxu0 0.0
    %759 = vmatpush1.xpose.msra.mxu0 0.0
    %760 = vmatprep.subr.mxu0 0.0
    %761 = vmatpush1.xpose.msra.mxu0 0.0
    %762 = vmatprep.subr.mxu0 0.0
    %763 = vmatpush1.xpose.msra.mxu0 0.0
    %764 = vmatprep.subr.mxu0 0.0
    %765 = vmatpush1.xpose.msra.mxu0 0.0
    %766 = vmatprep.subr.mxu0 0.0
    %767 = vmatpush1.xpose.msra.mxu0 0.0
    %768 = vmatprep.subr.mxu0 0.0
    %769 = vmatpush1.xpose.msra.mxu0 0.0
    %770 = vmatprep.subr.mxu0 0.0
    %771 = vmatpush1.xpose.msra.mxu0 0.0
    %772 = vmatprep.subr.mxu0 0.0
    %773 = vmatpush1.xpose.msra.mxu0 0.0
    %774 = vmatprep.mubr.f32.mxu0 0.0
    %775 = vmatmul.mubr.f32.gmra.mrb[0].mxu0 %v706
    %v776 = vpop.f32.mrb[0].mxu0
    %v777 = vadd.f32 0.0, %v776
    %v778 = vpop.f32.mrb[0].mxu0
    %779 = vdwg.mxu0
    %v780 = vsel %vm335, %v298, 0
    %v782 = vsel %vm335, %v312, 0
    %784 = vmatprep.subr.mxu0 0.0
    %785 = vmatpush1.xpose.msra.mxu0 %v782
    %786 = vmatprep.subr.mxu0 0.0
    %787 = vmatpush1.xpose.msra.mxu0 0.0
    %788 = vmatprep.subr.mxu0 0.0
    %789 = vmatpush1.xpose.msra.mxu0 0.0
    %790 = vmatprep.subr.mxu0 0.0
    %791 = vmatpush1.xpose.msra.mxu0 0.0
    %792 = vmatprep.subr.mxu0 0.0
    %793 = vmatpush1.xpose.msra.mxu0 0.0
    %794 = vmatprep.subr.mxu0 0.0
    %795 = vmatpush1.xpose.msra.mxu0 0.0
    %796 = vmatprep.subr.mxu0 0.0
    %797 = vmatpush1.xpose.msra.mxu0 0.0
    %798 = vmatprep.subr.mxu0 0.0
    %799 = vmatpush1.xpose.msra.mxu0 0.0
    %800 = vmatprep.subr.mxu0 0.0
    %801 = vmatpush1.xpose.msra.mxu0 0.0
    %802 = vmatprep.subr.mxu0 0.0
    %803 = vmatpush1.xpose.msra.mxu0 0.0
    %804 = vmatprep.subr.mxu0 0.0
    %805 = vmatpush1.xpose.msra.mxu0 0.0
    %806 = vmatprep.subr.mxu0 0.0
    %807 = vmatpush1.xpose.msra.mxu0 0.0
    %808 = vmatprep.subr.mxu0 0.0
    %809 = vmatpush1.xpose.msra.mxu0 0.0
    %810 = vmatprep.subr.mxu0 0.0
    %811 = vmatpush1.xpose.msra.mxu0 0.0
    %812 = vmatprep.subr.mxu0 0.0
    %813 = vmatpush1.xpose.msra.mxu0 0.0
    %814 = vmatprep.subr.mxu0 0.0
    %815 = vmatpush1.xpose.msra.mxu0 0.0
    %816 = vmatprep.subr.mxu0 0.0
    %817 = vmatpush1.xpose.msra.mxu0 0.0
    %818 = vmatprep.subr.mxu0 0.0
    %819 = vmatpush1.xpose.msra.mxu0 0.0
    %820 = vmatprep.subr.mxu0 0.0
    %821 = vmatpush1.xpose.msra.mxu0 0.0
    %822 = vmatprep.subr.mxu0 0.0
    %823 = vmatpush1.xpose.msra.mxu0 0.0
    %824 = vmatprep.subr.mxu0 0.0
    %825 = vmatpush1.xpose.msra.mxu0 0.0
    %826 = vmatprep.subr.mxu0 0.0
    %827 = vmatpush1.xpose.msra.mxu0 0.0
    %828 = vmatprep.subr.mxu0 0.0
    %829 = vmatpush1.xpose.msra.mxu0 0.0
    %830 = vmatprep.subr.mxu0 0.0
    %831 = vmatpush1.xpose.msra.mxu0 0.0
    %832 = vmatprep.subr.mxu0 0.0
    %833 = vmatpush1.xpose.msra.mxu0 0.0
    %834 = vmatprep.subr.mxu0 0.0
    %835 = vmatpush1.xpose.msra.mxu0 0.0
    %836 = vmatprep.subr.mxu0 0.0
    %837 = vmatpush1.xpose.msra.mxu0 0.0
    %838 = vmatprep.subr.mxu0 0.0
    %839 = vmatpush1.xpose.msra.mxu0 0.0
    %840 = vmatprep.subr.mxu0 0.0
    %841 = vmatpush1.xpose.msra.mxu0 0.0
    %842 = vmatprep.subr.mxu0 0.0
    %843 = vmatpush1.xpose.msra.mxu0 0.0
    %844 = vmatprep.subr.mxu0 0.0
    %845 = vmatpush1.xpose.msra.mxu0 0.0
    %846 = vmatprep.subr.mxu0 0.0
    %847 = vmatpush1.xpose.msra.mxu0 0.0
    %848 = vmatprep.mubr.f32.mxu0 0.0
    %849 = vmatmul.mubr.f32.gmra.mrb[0].mxu0 %v780
    %v850 = vpop.f32.mrb[0].mxu0
    %v851 = vadd.f32 0.0, %v850
    %v852 = vpop.f32.mrb[0].mxu0
    %853 = vdwg.mxu0
    %v854 = vsel %vm335, %v300, 0
    %v856 = vsel %vm335, %v314, 0
    %858 = vmatprep.subr.mxu0 0.0
    %859 = vmatpush1.xpose.msra.mxu0 %v856
    %860 = vmatprep.subr.mxu0 0.0
    %861 = vmatpush1.xpose.msra.mxu0 0.0
    %862 = vmatprep.subr.mxu0 0.0
    %863 = vmatpush1.xpose.msra.mxu0 0.0
    %864 = vmatprep.subr.mxu0 0.0
    %865 = vmatpush1.xpose.msra.mxu0 0.0
    %866 = vmatprep.subr.mxu0 0.0
    %867 = vmatpush1.xpose.msra.mxu0 0.0
    %868 = vmatprep.subr.mxu0 0.0
    %869 = vmatpush1.xpose.msra.mxu0 0.0
    %870 = vmatprep.subr.mxu0 0.0
    %871 = vmatpush1.xpose.msra.mxu0 0.0
    %872 = vmatprep.subr.mxu0 0.0
    %873 = vmatpush1.xpose.msra.mxu0 0.0
    %874 = vmatprep.subr.mxu0 0.0
    %875 = vmatpush1.xpose.msra.mxu0 0.0
    %876 = vmatprep.subr.mxu0 0.0
    %877 = vmatpush1.xpose.msra.mxu0 0.0
    %878 = vmatprep.subr.mxu0 0.0
    %879 = vmatpush1.xpose.msra.mxu0 0.0
    %880 = vmatprep.subr.mxu0 0.0
    %881 = vmatpush1.xpose.msra.mxu0 0.0
    %882 = vmatprep.subr.mxu0 0.0
    %883 = vmatpush1.xpose.msra.mxu0 0.0
    %884 = vmatprep.subr.mxu0 0.0
    %885 = vmatpush1.xpose.msra.mxu0 0.0
    %886 = vmatprep.subr.mxu0 0.0
    %887 = vmatpush1.xpose.msra.mxu0 0.0
    %888 = vmatprep.subr.mxu0 0.0
    %889 = vmatpush1.xpose.msra.mxu0 0.0
    %890 = vmatprep.subr.mxu0 0.0
    %891 = vmatpush1.xpose.msra.mxu0 0.0
    %892 = vmatprep.subr.mxu0 0.0
    %893 = vmatpush1.xpose.msra.mxu0 0.0
    %894 = vmatprep.subr.mxu0 0.0
    %895 = vmatpush1.xpose.msra.mxu0 0.0
    %896 = vmatprep.subr.mxu0 0.0
    %897 = vmatpush1.xpose.msra.mxu0 0.0
    %898 = vmatprep.subr.mxu0 0.0
    %899 = vmatpush1.xpose.msra.mxu0 0.0
    %900 = vmatprep.subr.mxu0 0.0
    %901 = vmatpush1.xpose.msra.mxu0 0.0
    %902 = vmatprep.subr.mxu0 0.0
    %903 = vmatpush1.xpose.msra.mxu0 0.0
    %904 = vmatprep.subr.mxu0 0.0
    %905 = vmatpush1.xpose.msra.mxu0 0.0
    %906 = vmatprep.subr.mxu0 0.0
    %907 = vmatpush1.xpose.msra.mxu0 0.0
    %908 = vmatprep.subr.mxu0 0.0
    %909 = vmatpush1.xpose.msra.mxu0 0.0
    %910 = vmatprep.subr.mxu0 0.0
    %911 = vmatpush1.xpose.msra.mxu0 0.0
    %912 = vmatprep.subr.mxu0 0.0
    %913 = vmatpush1.xpose.msra.mxu0 0.0
    %914 = vmatprep.subr.mxu0 0.0
    %915 = vmatpush1.xpose.msra.mxu0 0.0
    %916 = vmatprep.subr.mxu0 0.0
    %917 = vmatpush1.xpose.msra.mxu0 0.0
    %918 = vmatprep.subr.mxu0 0.0
    %919 = vmatpush1.xpose.msra.mxu0 0.0
    %920 = vmatprep.subr.mxu0 0.0
    %921 = vmatpush1.xpose.msra.mxu0 0.0
    %922 = vmatprep.mubr.f32.mxu0 0.0
    %923 = vmatmul.mubr.f32.gmra.mrb[0].mxu0 %v854
    %v924 = vpop.f32.mrb[0].mxu0
    %v925 = vadd.f32 0.0, %v924
    %v926 = vpop.f32.mrb[0].mxu0
    %927 = vdwg.mxu0
    %v928 = vsel %vm335, %v407, -inf
    %929 = vmax.xlane.f32.xlu0 %v928
    %v930 = vpop.xlane.xlu0 %929
    %v931 = vsel %vm335, %v481, -inf
    %932 = vmax.xlane.f32.xlu0 %v931
    %v933 = vpop.xlane.xlu0 %932
    %v934 = vsel %vm335, %v555, -inf
    %935 = vmax.xlane.f32.xlu0 %v934
    %v936 = vpop.xlane.xlu0 %935
    %v937 = vsel %vm335, %v629, -inf
    %938 = vmax.xlane.f32.xlu0 %v937
    %v939 = vpop.xlane.xlu0 %938
    %v940 = vsel %vm335, %v703, -inf
    %941 = vmax.xlane.f32.xlu0 %v940
    %v942 = vpop.xlane.xlu0 %941
    %v943 = vsel %vm335, %v777, -inf
    %944 = vmax.xlane.f32.xlu0 %v943
    %v945 = vpop.xlane.xlu0 %944
    %v946 = vsel %vm335, %v851, -inf
    %947 = vmax.xlane.f32.xlu0 %v946
    %v948 = vpop.xlane.xlu0 %947
    %v949 = vsel %vm335, %v925, -inf
    %950 = vmax.xlane.f32.xlu0 %v949
    %v951 = vpop.xlane.xlu0 %950
    %v952 = vsub.f32 %v407, %v930
    %v953 = vsub.f32 %v481, %v933
    %v954 = vsub.f32 %v555, %v936
    %v955 = vsub.f32 %v629, %v939
    %v956 = vsub.f32 %v703, %v942
    %v957 = vsub.f32 %v777, %v945
    %v958 = vsub.f32 %v851, %v948
    %v959 = vsub.f32 %v925, %v951
    %v960 = vmul.f32 %v952, 1.442695
    %v961 = vpow.pop %v960
    %v962 = vmul.f32 %v953, 1.442695
    %v963 = vpow.pop %v962
    %v964 = vmul.f32 %v954, 1.442695
    %v965 = vpow.pop %v964
    %v966 = vmul.f32 %v955, 1.442695
    %v967 = vpow.pop %v966
    %v968 = vmul.f32 %v956, 1.442695
    %v969 = vpow.pop %v968
    %v970 = vmul.f32 %v957, 1.442695
    %v971 = vpow.pop %v970
    %v972 = vmul.f32 %v958, 1.442695
    %v973 = vpow.pop %v972
    %v974 = vmul.f32 %v959, 1.442695
    %v975 = vpow.pop %v974
    %v976 = vsel %vm335, %v961, 0.0
    %977 = vadd.xlane.f32.xlu0 %v976
    %v978 = vpop.xlane.xlu0 %977
    %v979 = vsel %vm335, %v963, 0.0
    %980 = vadd.xlane.f32.xlu0 %v979
    %v981 = vpop.xlane.xlu0 %980
    %v982 = vsel %vm335, %v965, 0.0
    %983 = vadd.xlane.f32.xlu0 %v982
    %v984 = vpop.xlane.xlu0 %983
    %v985 = vsel %vm335, %v967, 0.0
    %986 = vadd.xlane.f32.xlu0 %v985
    %v987 = vpop.xlane.xlu0 %986
    %v988 = vsel %vm335, %v969, 0.0
    %989 = vadd.xlane.f32.xlu0 %v988
    %v990 = vpop.xlane.xlu0 %989
    %v991 = vsel %vm335, %v971, 0.0
    %992 = vadd.xlane.f32.xlu0 %v991
    %v993 = vpop.xlane.xlu0 %992
    %v994 = vsel %vm335, %v973, 0.0
    %995 = vadd.xlane.f32.xlu0 %v994
    %v996 = vpop.xlane.xlu0 %995
    %v997 = vsel %vm335, %v975, 0.0
    %998 = vadd.xlane.f32.xlu0 %v997
    %v999 = vpop.xlane.xlu0 %998
    %v1000 = vrcp.pop %v978
    %v1001 = vmul.f32 %v961, %v1000
    %v1002 = vrcp.pop %v981
    %v1003 = vmul.f32 %v963, %v1002
    %v1004 = vrcp.pop %v984
    %v1005 = vmul.f32 %v965, %v1004
    %v1006 = vrcp.pop %v987
    %v1007 = vmul.f32 %v967, %v1006
    %v1008 = vrcp.pop %v990
    %v1009 = vmul.f32 %v969, %v1008
    %v1010 = vrcp.pop %v993
    %v1011 = vmul.f32 %v971, %v1010
    %v1012 = vrcp.pop %v996
    %v1013 = vmul.f32 %v973, %v1012
    %v1014 = vrcp.pop %v999
    %v1015 = vmul.f32 %v975, %v1014
    %v1017 = vsel %vm335, %v1001, 0
    %1019 = vmatprep.subr.mxu0 0.0
    %1020 = vmatpush1.msra.mxu0 %v279
    %1021 = vmatprep.subr.mxu0 0.0
    %1022 = vmatpush1.msra.mxu0 0.0
    %1023 = vmatprep.subr.mxu0 0.0
    %1024 = vmatpush1.msra.mxu0 0.0
    %1025 = vmatprep.subr.mxu0 0.0
    %1026 = vmatpush1.msra.mxu0 0.0
    %1027 = vmatprep.subr.mxu0 0.0
    %1028 = vmatpush1.msra.mxu0 0.0
    %1029 = vmatprep.subr.mxu0 0.0
    %1030 = vmatpush1.msra.mxu0 0.0
    %1031 = vmatprep.subr.mxu0 0.0
    %1032 = vmatpush1.msra.mxu0 0.0
    %1033 = vmatprep.subr.mxu0 0.0
    %1034 = vmatpush1.msra.mxu0 0.0
    %1035 = vmatprep.subr.mxu0 0.0
    %1036 = vmatpush1.msra.mxu0 0.0
    %1037 = vmatprep.subr.mxu0 0.0
    %1038 = vmatpush1.msra.mxu0 0.0
    %1039 = vmatprep.subr.mxu0 0.0
    %1040 = vmatpush1.msra.mxu0 0.0
    %1041 = vmatprep.subr.mxu0 0.0
    %1042 = vmatpush1.msra.mxu0 0.0
    %1043 = vmatprep.subr.mxu0 0.0
    %1044 = vmatpush1.msra.mxu0 0.0
    %1045 = vmatprep.subr.mxu0 0.0
    %1046 = vmatpush1.msra.mxu0 0.0
    %1047 = vmatprep.subr.mxu0 0.0
    %1048 = vmatpush1.msra.mxu0 0.0
    %1049 = vmatprep.subr.mxu0 0.0
    %1050 = vmatpush1.msra.mxu0 0.0
    %1051 = vmatprep.subr.mxu0 0.0
    %1052 = vmatpush1.msra.mxu0 0.0
    %1053 = vmatprep.subr.mxu0 0.0
    %1054 = vmatpush1.msra.mxu0 0.0
    %1055 = vmatprep.subr.mxu0 0.0
    %1056 = vmatpush1.msra.mxu0 0.0
    %1057 = vmatprep.subr.mxu0 0.0
    %1058 = vmatpush1.msra.mxu0 0.0
    %1059 = vmatprep.subr.mxu0 0.0
    %1060 = vmatpush1.msra.mxu0 0.0
    %1061 = vmatprep.subr.mxu0 0.0
    %1062 = vmatpush1.msra.mxu0 0.0
    %1063 = vmatprep.subr.mxu0 0.0
    %1064 = vmatpush1.msra.mxu0 0.0
    %1065 = vmatprep.subr.mxu0 0.0
    %1066 = vmatpush1.msra.mxu0 0.0
    %1067 = vmatprep.subr.mxu0 0.0
    %1068 = vmatpush1.msra.mxu0 0.0
    %1069 = vmatprep.subr.mxu0 0.0
    %1070 = vmatpush1.msra.mxu0 0.0
    %1071 = vmatprep.subr.mxu0 0.0
    %1072 = vmatpush1.msra.mxu0 0.0
    %1073 = vmatprep.subr.mxu0 0.0
    %1074 = vmatpush1.msra.mxu0 0.0
    %1075 = vmatprep.subr.mxu0 0.0
    %1076 = vmatpush1.msra.mxu0 0.0
    %1077 = vmatprep.subr.mxu0 0.0
    %1078 = vmatpush1.msra.mxu0 0.0
    %1079 = vmatprep.subr.mxu0 0.0
    %1080 = vmatpush1.msra.mxu0 0.0
    %1081 = vmatprep.subr.mxu0 0.0
    %1082 = vmatpush1.msra.mxu0 0.0
    %1083 = vmatprep.mubr.f32.mxu0 0.0
    %1084 = vmatmul.mubr.f32.gmra.mrb[0].mxu0 %v1017
    %v1085 = vpop.f32.mrb[0].mxu0
    %v1086 = vadd.f32 0.0, %v1085
    %v1087 = vpop.f32.mrb[0].mxu0
    %1088 = vdwg.mxu0
    %v1090 = vsel %vm335, %v1003, 0
    %1092 = vmatprep.subr.mxu0 0.0
    %1093 = vmatpush1.msra.mxu0 %v284
    %1094 = vmatprep.subr.mxu0 0.0
    %1095 = vmatpush1.msra.mxu0 0.0
    %1096 = vmatprep.subr.mxu0 0.0
    %1097 = vmatpush1.msra.mxu0 0.0
    %1098 = vmatprep.subr.mxu0 0.0
    %1099 = vmatpush1.msra.mxu0 0.0
    %1100 = vmatprep.subr.mxu0 0.0
    %1101 = vmatpush1.msra.mxu0 0.0
    %1102 = vmatprep.subr.mxu0 0.0
    %1103 = vmatpush1.msra.mxu0 0.0
    %1104 = vmatprep.subr.mxu0 0.0
    %1105 = vmatpush1.msra.mxu0 0.0
    %1106 = vmatprep.subr.mxu0 0.0
    %1107 = vmatpush1.msra.mxu0 0.0
    %1108 = vmatprep.subr.mxu0 0.0
    %1109 = vmatpush1.msra.mxu0 0.0
    %1110 = vmatprep.subr.mxu0 0.0
    %1111 = vmatpush1.msra.mxu0 0.0
    %1112 = vmatprep.subr.mxu0 0.0
    %1113 = vmatpush1.msra.mxu0 0.0
    %1114 = vmatprep.subr.mxu0 0.0
    %1115 = vmatpush1.msra.mxu0 0.0
    %1116 = vmatprep.subr.mxu0 0.0
    %1117 = vmatpush1.msra.mxu0 0.0
    %1118 = vmatprep.subr.mxu0 0.0
    %1119 = vmatpush1.msra.mxu0 0.0
    %1120 = vmatprep.subr.mxu0 0.0
    %1121 = vmatpush1.msra.mxu0 0.0
    %1122 = vmatprep.subr.mxu0 0.0
    %1123 = vmatpush1.msra.mxu0 0.0
    %1124 = vmatprep.subr.mxu0 0.0
    %1125 = vmatpush1.msra.mxu0 0.0
    %1126 = vmatprep.subr.mxu0 0.0
    %1127 = vmatpush1.msra.mxu0 0.0
    %1128 = vmatprep.subr.mxu0 0.0
    %1129 = vmatpush1.msra.mxu0 0.0
    %1130 = vmatprep.subr.mxu0 0.0
    %1131 = vmatpush1.msra.mxu0 0.0
    %1132 = vmatprep.subr.mxu0 0.0
    %1133 = vmatpush1.msra.mxu0 0.0
    %1134 = vmatprep.subr.mxu0 0.0
    %1135 = vmatpush1.msra.mxu0 0.0
    %1136 = vmatprep.subr.mxu0 0.0
    %1137 = vmatpush1.msra.mxu0 0.0
    %1138 = vmatprep.subr.mxu0 0.0
    %1139 = vmatpush1.msra.mxu0 0.0
    %1140 = vmatprep.subr.mxu0 0.0
    %1141 = vmatpush1.msra.mxu0 0.0
    %1142 = vmatprep.subr.mxu0 0.0
    %1143 = vmatpush1.msra.mxu0 0.0
    %1144 = vmatprep.subr.mxu0 0.0
    %1145 = vmatpush1.msra.mxu0 0.0
    %1146 = vmatprep.subr.mxu0 0.0
    %1147 = vmatpush1.msra.mxu0 0.0
    %1148 = vmatprep.subr.mxu0 0.0
    %1149 = vmatpush1.msra.mxu0 0.0
    %1150 = vmatprep.subr.mxu0 0.0
    %1151 = vmatpush1.msra.mxu0 0.0
    %1152 = vmatprep.subr.mxu0 0.0
    %1153 = vmatpush1.msra.mxu0 0.0
    %1154 = vmatprep.subr.mxu0 0.0
    %1155 = vmatpush1.msra.mxu0 0.0
    %1156 = vmatprep.mubr.f32.mxu0 0.0
    %1157 = vmatmul.mubr.f32.gmra.mrb[0].mxu0 %v1090
    %v1158 = vpop.f32.mrb[0].mxu0
    %v1159 = vadd.f32 0.0, %v1158
    %v1160 = vpop.f32.mrb[0].mxu0
    %1161 = vdwg.mxu0
    %v1163 = vsel %vm335, %v1005, 0
    %1165 = vmatprep.subr.mxu0 0.0
    %1166 = vmatpush1.msra.mxu0 %v318
    %1167 = vmatprep.subr.mxu0 0.0
    %1168 = vmatpush1.msra.mxu0 0.0
    %1169 = vmatprep.subr.mxu0 0.0
    %1170 = vmatpush1.msra.mxu0 0.0
    %1171 = vmatprep.subr.mxu0 0.0
    %1172 = vmatpush1.msra.mxu0 0.0
    %1173 = vmatprep.subr.mxu0 0.0
    %1174 = vmatpush1.msra.mxu0 0.0
    %1175 = vmatprep.subr.mxu0 0.0
    %1176 = vmatpush1.msra.mxu0 0.0
    %1177 = vmatprep.subr.mxu0 0.0
    %1178 = vmatpush1.msra.mxu0 0.0
    %1179 = vmatprep.subr.mxu0 0.0
    %1180 = vmatpush1.msra.mxu0 0.0
    %1181 = vmatprep.subr.mxu0 0.0
    %1182 = vmatpush1.msra.mxu0 0.0
    %1183 = vmatprep.subr.mxu0 0.0
    %1184 = vmatpush1.msra.mxu0 0.0
    %1185 = vmatprep.subr.mxu0 0.0
    %1186 = vmatpush1.msra.mxu0 0.0
    %1187 = vmatprep.subr.mxu0 0.0
    %1188 = vmatpush1.msra.mxu0 0.0
    %1189 = vmatprep.subr.mxu0 0.0
    %1190 = vmatpush1.msra.mxu0 0.0
    %1191 = vmatprep.subr.mxu0 0.0
    %1192 = vmatpush1.msra.mxu0 0.0
    %1193 = vmatprep.subr.mxu0 0.0
    %1194 = vmatpush1.msra.mxu0 0.0
    %1195 = vmatprep.subr.mxu0 0.0
    %1196 = vmatpush1.msra.mxu0 0.0
    %1197 = vmatprep.subr.mxu0 0.0
    %1198 = vmatpush1.msra.mxu0 0.0
    %1199 = vmatprep.subr.mxu0 0.0
    %1200 = vmatpush1.msra.mxu0 0.0
    %1201 = vmatprep.subr.mxu0 0.0
    %1202 = vmatpush1.msra.mxu0 0.0
    %1203 = vmatprep.subr.mxu0 0.0
    %1204 = vmatpush1.msra.mxu0 0.0
    %1205 = vmatprep.subr.mxu0 0.0
    %1206 = vmatpush1.msra.mxu0 0.0
    %1207 = vmatprep.subr.mxu0 0.0
    %1208 = vmatpush1.msra.mxu0 0.0
    %1209 = vmatprep.subr.mxu0 0.0
    %1210 = vmatpush1.msra.mxu0 0.0
    %1211 = vmatprep.subr.mxu0 0.0
    %1212 = vmatpush1.msra.mxu0 0.0
    %1213 = vmatprep.subr.mxu0 0.0
    %1214 = vmatpush1.msra.mxu0 0.0
    %1215 = vmatprep.subr.mxu0 0.0
    %1216 = vmatpush1.msra.mxu0 0.0
    %1217 = vmatprep.subr.mxu0 0.0
    %1218 = vmatpush1.msra.mxu0 0.0
    %1219 = vmatprep.subr.mxu0 0.0
    %1220 = vmatpush1.msra.mxu0 0.0
    %1221 = vmatprep.subr.mxu0 0.0
    %1222 = vmatpush1.msra.mxu0 0.0
    %1223 = vmatprep.subr.mxu0 0.0
    %1224 = vmatpush1.msra.mxu0 0.0
    %1225 = vmatprep.subr.mxu0 0.0
    %1226 = vmatpush1.msra.mxu0 0.0
    %1227 = vmatprep.subr.mxu0 0.0
    %1228 = vmatpush1.msra.mxu0 0.0
    %1229 = vmatprep.mubr.f32.mxu0 0.0
    %1230 = vmatmul.mubr.f32.gmra.mrb[0].mxu0 %v1163
    %v1231 = vpop.f32.mrb[0].mxu0
    %v1232 = vadd.f32 0.0, %v1231
    %v1233 = vpop.f32.mrb[0].mxu0
    %1234 = vdwg.mxu0
    %v1236 = vsel %vm335, %v1007, 0
    %1238 = vmatprep.subr.mxu0 0.0
    %1239 = vmatpush1.msra.mxu0 %v320
    %1240 = vmatprep.subr.mxu0 0.0
    %1241 = vmatpush1.msra.mxu0 0.0
    %1242 = vmatprep.subr.mxu0 0.0
    %1243 = vmatpush1.msra.mxu0 0.0
    %1244 = vmatprep.subr.mxu0 0.0
    %1245 = vmatpush1.msra.mxu0 0.0
    %1246 = vmatprep.subr.mxu0 0.0
    %1247 = vmatpush1.msra.mxu0 0.0
    %1248 = vmatprep.subr.mxu0 0.0
    %1249 = vmatpush1.msra.mxu0 0.0
    %1250 = vmatprep.subr.mxu0 0.0
    %1251 = vmatpush1.msra.mxu0 0.0
    %1252 = vmatprep.subr.mxu0 0.0
    %1253 = vmatpush1.msra.mxu0 0.0
    %1254 = vmatprep.subr.mxu0 0.0
    %1255 = vmatpush1.msra.mxu0 0.0
    %1256 = vmatprep.subr.mxu0 0.0
    %1257 = vmatpush1.msra.mxu0 0.0
    %1258 = vmatprep.subr.mxu0 0.0
    %1259 = vmatpush1.msra.mxu0 0.0
    %1260 = vmatprep.subr.mxu0 0.0
    %1261 = vmatpush1.msra.mxu0 0.0
    %1262 = vmatprep.subr.mxu0 0.0
    %1263 = vmatpush1.msra.mxu0 0.0
    %1264 = vmatprep.subr.mxu0 0.0
    %1265 = vmatpush1.msra.mxu0 0.0
    %1266 = vmatprep.subr.mxu0 0.0
    %1267 = vmatpush1.msra.mxu0 0.0
    %1268 = vmatprep.subr.mxu0 0.0
    %1269 = vmatpush1.msra.mxu0 0.0
    %1270 = vmatprep.subr.mxu0 0.0
    %1271 = vmatpush1.msra.mxu0 0.0
    %1272 = vmatprep.subr.mxu0 0.0
    %1273 = vmatpush1.msra.mxu0 0.0
    %1274 = vmatprep.subr.mxu0 0.0
    %1275 = vmatpush1.msra.mxu0 0.0
    %1276 = vmatprep.subr.mxu0 0.0
    %1277 = vmatpush1.msra.mxu0 0.0
    %1278 = vmatprep.subr.mxu0 0.0
    %1279 = vmatpush1.msra.mxu0 0.0
    %1280 = vmatprep.subr.mxu0 0.0
    %1281 = vmatpush1.msra.mxu0 0.0
    %1282 = vmatprep.subr.mxu0 0.0
    %1283 = vmatpush1.msra.mxu0 0.0
    %1284 = vmatprep.subr.mxu0 0.0
    %1285 = vmatpush1.msra.mxu0 0.0
    %1286 = vmatprep.subr.mxu0 0.0
    %1287 = vmatpush1.msra.mxu0 0.0
    %1288 = vmatprep.subr.mxu0 0.0
    %1289 = vmatpush1.msra.mxu0 0.0
    %1290 = vmatprep.subr.mxu0 0.0
    %1291 = vmatpush1.msra.mxu0 0.0
    %1292 = vmatprep.subr.mxu0 0.0
    %1293 = vmatpush1.msra.mxu0 0.0
    %1294 = vmatprep.subr.mxu0 0.0
    %1295 = vmatpush1.msra.mxu0 0.0
    %1296 = vmatprep.subr.mxu0 0.0
    %1297 = vmatpush1.msra.mxu0 0.0
    %1298 = vmatprep.subr.mxu0 0.0
    %1299 = vmatpush1.msra.mxu0 0.0
    %1300 = vmatprep.subr.mxu0 0.0
    %1301 = vmatpush1.msra.mxu0 0.0
    %1302 = vmatprep.mubr.f32.mxu0 0.0
    %1303 = vmatmul.mubr.f32.gmra.mrb[0].mxu0 %v1236
    %v1304 = vpop.f32.mrb[0].mxu0
    %v1305 = vadd.f32 0.0, %v1304
    %v1306 = vpop.f32.mrb[0].mxu0
    %1307 = vdwg.mxu0
    %v1309 = vsel %vm335, %v1009, 0
    %1311 = vmatprep.subr.mxu0 0.0
    %1312 = vmatpush1.msra.mxu0 %v324
    %1313 = vmatprep.subr.mxu0 0.0
    %1314 = vmatpush1.msra.mxu0 0.0
    %1315 = vmatprep.subr.mxu0 0.0
    %1316 = vmatpush1.msra.mxu0 0.0
    %1317 = vmatprep.subr.mxu0 0.0
    %1318 = vmatpush1.msra.mxu0 0.0
    %1319 = vmatprep.subr.mxu0 0.0
    %1320 = vmatpush1.msra.mxu0 0.0
    %1321 = vmatprep.subr.mxu0 0.0
    %1322 = vmatpush1.msra.mxu0 0.0
    %1323 = vmatprep.subr.mxu0 0.0
    %1324 = vmatpush1.msra.mxu0 0.0
    %1325 = vmatprep.subr.mxu0 0.0
    %1326 = vmatpush1.msra.mxu0 0.0
    %1327 = vmatprep.subr.mxu0 0.0
    %1328 = vmatpush1.msra.mxu0 0.0
    %1329 = vmatprep.subr.mxu0 0.0
    %1330 = vmatpush1.msra.mxu0 0.0
    %1331 = vmatprep.subr.mxu0 0.0
    %1332 = vmatpush1.msra.mxu0 0.0
    %1333 = vmatprep.subr.mxu0 0.0
    %1334 = vmatpush1.msra.mxu0 0.0
    %1335 = vmatprep.subr.mxu0 0.0
    %1336 = vmatpush1.msra.mxu0 0.0
    %1337 = vmatprep.subr.mxu0 0.0
    %1338 = vmatpush1.msra.mxu0 0.0
    %1339 = vmatprep.subr.mxu0 0.0
    %1340 = vmatpush1.msra.mxu0 0.0
    %1341 = vmatprep.subr.mxu0 0.0
    %1342 = vmatpush1.msra.mxu0 0.0
    %1343 = vmatprep.subr.mxu0 0.0
    %1344 = vmatpush1.msra.mxu0 0.0
    %1345 = vmatprep.subr.mxu0 0.0
    %1346 = vmatpush1.msra.mxu0 0.0
    %1347 = vmatprep.subr.mxu0 0.0
    %1348 = vmatpush1.msra.mxu0 0.0
    %1349 = vmatprep.subr.mxu0 0.0
    %1350 = vmatpush1.msra.mxu0 0.0
    %1351 = vmatprep.subr.mxu0 0.0
    %1352 = vmatpush1.msra.mxu0 0.0
    %1353 = vmatprep.subr.mxu0 0.0
    %1354 = vmatpush1.msra.mxu0 0.0
    %1355 = vmatprep.subr.mxu0 0.0
    %1356 = vmatpush1.msra.mxu0 0.0
    %1357 = vmatprep.subr.mxu0 0.0
    %1358 = vmatpush1.msra.mxu0 0.0
    %1359 = vmatprep.subr.mxu0 0.0
    %1360 = vmatpush1.msra.mxu0 0.0
    %1361 = vmatprep.subr.mxu0 0.0
    %1362 = vmatpush1.msra.mxu0 0.0
    %1363 = vmatprep.subr.mxu0 0.0
    %1364 = vmatpush1.msra.mxu0 0.0
    %1365 = vmatprep.subr.mxu0 0.0
    %1366 = vmatpush1.msra.mxu0 0.0
    %1367 = vmatprep.subr.mxu0 0.0
    %1368 = vmatpush1.msra.mxu0 0.0
    %1369 = vmatprep.subr.mxu0 0.0
    %1370 = vmatpush1.msra.mxu0 0.0
    %1371 = vmatprep.subr.mxu0 0.0
    %1372 = vmatpush1.msra.mxu0 0.0
    %1373 = vmatprep.subr.mxu0 0.0
    %1374 = vmatpush1.msra.mxu0 0.0
    %1375 = vmatprep.mubr.f32.mxu0 0.0
    %1376 = vmatmul.mubr.f32.gmra.mrb[0].mxu0 %v1309
    %v1377 = vpop.f32.mrb[0].mxu0
    %v1378 = vadd.f32 0.0, %v1377
    %v1379 = vpop.f32.mrb[0].mxu0
    %1380 = vdwg.mxu0
    %v1382 = vsel %vm335, %v1011, 0
    %1384 = vmatprep.subr.mxu0 0.0
    %1385 = vmatpush1.msra.mxu0 %v326
    %1386 = vmatprep.subr.mxu0 0.0
    %1387 = vmatpush1.msra.mxu0 0.0
    %1388 = vmatprep.subr.mxu0 0.0
    %1389 = vmatpush1.msra.mxu0 0.0
    %1390 = vmatprep.subr.mxu0 0.0
    %1391 = vmatpush1.msra.mxu0 0.0
    %1392 = vmatprep.subr.mxu0 0.0
    %1393 = vmatpush1.msra.mxu0 0.0
    %1394 = vmatprep.subr.mxu0 0.0
    %1395 = vmatpush1.msra.mxu0 0.0
    %1396 = vmatprep.subr.mxu0 0.0
    %1397 = vmatpush1.msra.mxu0 0.0
    %1398 = vmatprep.subr.mxu0 0.0
    %1399 = vmatpush1.msra.mxu0 0.0
    %1400 = vmatprep.subr.mxu0 0.0
    %1401 = vmatpush1.msra.mxu0 0.0
    %1402 = vmatprep.subr.mxu0 0.0
    %1403 = vmatpush1.msra.mxu0 0.0
    %1404 = vmatprep.subr.mxu0 0.0
    %1405 = vmatpush1.msra.mxu0 0.0
    %1406 = vmatprep.subr.mxu0 0.0
    %1407 = vmatpush1.msra.mxu0 0.0
    %1408 = vmatprep.subr.mxu0 0.0
    %1409 = vmatpush1.msra.mxu0 0.0
    %1410 = vmatprep.subr.mxu0 0.0
    %1411 = vmatpush1.msra.mxu0 0.0
    %1412 = vmatprep.subr.mxu0 0.0
    %1413 = vmatpush1.msra.mxu0 0.0
    %1414 = vmatprep.subr.mxu0 0.0
    %1415 = vmatpush1.msra.mxu0 0.0
    %1416 = vmatprep.subr.mxu0 0.0
    %1417 = vmatpush1.msra.mxu0 0.0
    %1418 = vmatprep.subr.mxu0 0.0
    %1419 = vmatpush1.msra.mxu0 0.0
    %1420 = vmatprep.subr.mxu0 0.0
    %1421 = vmatpush1.msra.mxu0 0.0
    %1422 = vmatprep.subr.mxu0 0.0
    %1423 = vmatpush1.msra.mxu0 0.0
    %1424 = vmatprep.subr.mxu0 0.0
    %1425 = vmatpush1.msra.mxu0 0.0
    %1426 = vmatprep.subr.mxu0 0.0
    %1427 = vmatpush1.msra.mxu0 0.0
    %1428 = vmatprep.subr.mxu0 0.0
    %1429 = vmatpush1.msra.mxu0 0.0
    %1430 = vmatprep.subr.mxu0 0.0
    %1431 = vmatpush1.msra.mxu0 0.0
    %1432 = vmatprep.subr.mxu0 0.0
    %1433 = vmatpush1.msra.mxu0 0.0
    %1434 = vmatprep.subr.mxu0 0.0
    %1435 = vmatpush1.msra.mxu0 0.0
    %1436 = vmatprep.subr.mxu0 0.0
    %1437 = vmatpush1.msra.mxu0 0.0
    %1438 = vmatprep.subr.mxu0 0.0
    %1439 = vmatpush1.msra.mxu0 0.0
    %1440 = vmatprep.subr.mxu0 0.0
    %1441 = vmatpush1.msra.mxu0 0.0
    %1442 = vmatprep.subr.mxu0 0.0
    %1443 = vmatpush1.msra.mxu0 0.0
    %1444 = vmatprep.subr.mxu0 0.0
    %1445 = vmatpush1.msra.mxu0 0.0
    %1446 = vmatprep.subr.mxu0 0.0
    %1447 = vmatpush1.msra.mxu0 0.0
    %1448 = vmatprep.mubr.f32.mxu0 0.0
    %1449 = vmatmul.mubr.f32.gmra.mrb[0].mxu0 %v1382
    %v1450 = vpop.f32.mrb[0].mxu0
    %v1451 = vadd.f32 0.0, %v1450
    %v1452 = vpop.f32.mrb[0].mxu0
    %1453 = vdwg.mxu0
    %v1455 = vsel %vm335, %v1013, 0
    %1457 = vmatprep.subr.mxu0 0.0
    %1458 = vmatpush1.msra.mxu0 %v330
    %1459 = vmatprep.subr.mxu0 0.0
    %1460 = vmatpush1.msra.mxu0 0.0
    %1461 = vmatprep.subr.mxu0 0.0
    %1462 = vmatpush1.msra.mxu0 0.0
    %1463 = vmatprep.subr.mxu0 0.0
    %1464 = vmatpush1.msra.mxu0 0.0
    %1465 = vmatprep.subr.mxu0 0.0
    %1466 = vmatpush1.msra.mxu0 0.0
    %1467 = vmatprep.subr.mxu0 0.0
    %1468 = vmatpush1.msra.mxu0 0.0
    %1469 = vmatprep.subr.mxu0 0.0
    %1470 = vmatpush1.msra.mxu0 0.0
    %1471 = vmatprep.subr.mxu0 0.0
    %1472 = vmatpush1.msra.mxu0 0.0
    %1473 = vmatprep.subr.mxu0 0.0
    %1474 = vmatpush1.msra.mxu0 0.0
    %1475 = vmatprep.subr.mxu0 0.0
    %1476 = vmatpush1.msra.mxu0 0.0
    %1477 = vmatprep.subr.mxu0 0.0
    %1478 = vmatpush1.msra.mxu0 0.0
    %1479 = vmatprep.subr.mxu0 0.0
    %1480 = vmatpush1.msra.mxu0 0.0
    %1481 = vmatprep.subr.mxu0 0.0
    %1482 = vmatpush1.msra.mxu0 0.0
    %1483 = vmatprep.subr.mxu0 0.0
    %1484 = vmatpush1.msra.mxu0 0.0
    %1485 = vmatprep.subr.mxu0 0.0
    %1486 = vmatpush1.msra.mxu0 0.0
    %1487 = vmatprep.subr.mxu0 0.0
    %1488 = vmatpush1.msra.mxu0 0.0
    %1489 = vmatprep.subr.mxu0 0.0
    %1490 = vmatpush1.msra.mxu0 0.0
    %1491 = vmatprep.subr.mxu0 0.0
    %1492 = vmatpush1.msra.mxu0 0.0
    %1493 = vmatprep.subr.mxu0 0.0
    %1494 = vmatpush1.msra.mxu0 0.0
    %1495 = vmatprep.subr.mxu0 0.0
    %1496 = vmatpush1.msra.mxu0 0.0
    %1497 = vmatprep.subr.mxu0 0.0
    %1498 = vmatpush1.msra.mxu0 0.0
    %1499 = vmatprep.subr.mxu0 0.0
    %1500 = vmatpush1.msra.mxu0 0.0
    %1501 = vmatprep.subr.mxu0 0.0
    %1502 = vmatpush1.msra.mxu0 0.0
    %1503 = vmatprep.subr.mxu0 0.0
    %1504 = vmatpush1.msra.mxu0 0.0
    %1505 = vmatprep.subr.mxu0 0.0
    %1506 = vmatpush1.msra.mxu0 0.0
    %1507 = vmatprep.subr.mxu0 0.0
    %1508 = vmatpush1.msra.mxu0 0.0
    %1509 = vmatprep.subr.mxu0 0.0
    %1510 = vmatpush1.msra.mxu0 0.0
    %1511 = vmatprep.subr.mxu0 0.0
    %1512 = vmatpush1.msra.mxu0 0.0
    %1513 = vmatprep.subr.mxu0 0.0
    %1514 = vmatpush1.msra.mxu0 0.0
    %1515 = vmatprep.subr.mxu0 0.0
    %1516 = vmatpush1.msra.mxu0 0.0
    %1517 = vmatprep.subr.mxu0 0.0
    %1518 = vmatpush1.msra.mxu0 0.0
    %1519 = vmatprep.subr.mxu0 0.0
    %1520 = vmatpush1.msra.mxu0 0.0
    %1521 = vmatprep.mubr.f32.mxu0 0.0
    %1522 = vmatmul.mubr.f32.gmra.mrb[0].mxu0 %v1455
    %v1523 = vpop.f32.mrb[0].mxu0
    %v1524 = vadd.f32 0.0, %v1523
    %v1525 = vpop.f32.mrb[0].mxu0
    %1526 = vdwg.mxu0
    %v1528 = vsel %vm335, %v1015, 0
    %1530 = vmatprep.subr.mxu0 0.0
    %1531 = vmatpush1.msra.mxu0 %v332
    %1532 = vmatprep.subr.mxu0 0.0
    %1533 = vmatpush1.msra.mxu0 0.0
    %1534 = vmatprep.subr.mxu0 0.0
    %1535 = vmatpush1.msra.mxu0 0.0
    %1536 = vmatprep.subr.mxu0 0.0
    %1537 = vmatpush1.msra.mxu0 0.0
    %1538 = vmatprep.subr.mxu0 0.0
    %1539 = vmatpush1.msra.mxu0 0.0
    %1540 = vmatprep.subr.mxu0 0.0
    %1541 = vmatpush1.msra.mxu0 0.0
    %1542 = vmatprep.subr.mxu0 0.0
    %1543 = vmatpush1.msra.mxu0 0.0
    %1544 = vmatprep.subr.mxu0 0.0
    %1545 = vmatpush1.msra.mxu0 0.0
    %1546 = vmatprep.subr.mxu0 0.0
    %1547 = vmatpush1.msra.mxu0 0.0
    %1548 = vmatprep.subr.mxu0 0.0
    %1549 = vmatpush1.msra.mxu0 0.0
    %1550 = vmatprep.subr.mxu0 0.0
    %1551 = vmatpush1.msra.mxu0 0.0
    %1552 = vmatprep.subr.mxu0 0.0
    %1553 = vmatpush1.msra.mxu0 0.0
    %1554 = vmatprep.subr.mxu0 0.0
    %1555 = vmatpush1.msra.mxu0 0.0
    %1556 = vmatprep.subr.mxu0 0.0
    %1557 = vmatpush1.msra.mxu0 0.0
    %1558 = vmatprep.subr.mxu0 0.0
    %1559 = vmatpush1.msra.mxu0 0.0
    %1560 = vmatprep.subr.mxu0 0.0
    %1561 = vmatpush1.msra.mxu0 0.0
    %1562 = vmatprep.subr.mxu0 0.0
    %1563 = vmatpush1.msra.mxu0 0.0
    %1564 = vmatprep.subr.mxu0 0.0
    %1565 = vmatpush1.msra.mxu0 0.0
    %1566 = vmatprep.subr.mxu0 0.0
    %1567 = vmatpush1.msra.mxu0 0.0
    %1568 = vmatprep.subr.mxu0 0.0
    %1569 = vmatpush1.msra.mxu0 0.0
    %1570 = vmatprep.subr.mxu0 0.0
    %1571 = vmatpush1.msra.mxu0 0.0
    %1572 = vmatprep.subr.mxu0 0.0
    %1573 = vmatpush1.msra.mxu0 0.0
    %1574 = vmatprep.subr.mxu0 0.0
    %1575 = vmatpush1.msra.mxu0 0.0
    %1576 = vmatprep.subr.mxu0 0.0
    %1577 = vmatpush1.msra.mxu0 0.0
    %1578 = vmatprep.subr.mxu0 0.0
    %1579 = vmatpush1.msra.mxu0 0.0
    %1580 = vmatprep.subr.mxu0 0.0
    %1581 = vmatpush1.msra.mxu0 0.0
    %1582 = vmatprep.subr.mxu0 0.0
    %1583 = vmatpush1.msra.mxu0 0.0
    %1584 = vmatprep.subr.mxu0 0.0
    %1585 = vmatpush1.msra.mxu0 0.0
    %1586 = vmatprep.subr.mxu0 0.0
    %1587 = vmatpush1.msra.mxu0 0.0
    %1588 = vmatprep.subr.mxu0 0.0
    %1589 = vmatpush1.msra.mxu0 0.0
    %1590 = vmatprep.subr.mxu0 0.0
    %1591 = vmatpush1.msra.mxu0 0.0
    %1592 = vmatprep.subr.mxu0 0.0
    %1593 = vmatpush1.msra.mxu0 0.0
    %1594 = vmatprep.mubr.f32.mxu0 0.0
    %1595 = vmatmul.mubr.f32.gmra.mrb[0].mxu0 %v1528
    %v1596 = vpop.f32.mrb[0].mxu0
    %v1597 = vadd.f32 0.0, %v1596
    %v1598 = vpop.f32.mrb[0].mxu0
    %1599 = vdwg.mxu0
    %1602 = vrot.lane.b32.xlu0 %v1232, 8
    %v1603 = vpop.permute.xlu0 %1602
    %1604 = vrot.lane.b32.xlu0 %v1305, 8
    %v1605 = vpop.permute.xlu0 %1604
    %1610 = vrot.lane.b32.xlu0 %v1378, 16
    %v1611 = vpop.permute.xlu0 %1610
    %1612 = vrot.lane.b32.xlu0 %v1451, 16
    %v1613 = vpop.permute.xlu0 %1612
    %1618 = vrot.lane.b32.xlu0 %v1524, 24
    %v1619 = vpop.permute.xlu0 %1618
    %1620 = vrot.lane.b32.xlu0 %v1597, 24
    %v1621 = vpop.permute.xlu0 %1620
    %v1624 = vsel %vm335, %v1086, %v1603
    %v1625 = vsel %vm335, %v1159, %v1605
    %vm1626 = vcmask 130048
    %v1627 = vsel %vm1626, %v1624, %v1611
    %v1628 = vsel %vm1626, %v1625, %v1613
    %vm1629 = vcmask 195584
    %v1630 = vsel %vm1629, %v1627, %v1619
    %v1631 = vsel %vm1629, %v1628, %v1621
    %vm1632 = vcmask 261120
    %1633 = vst.msk [vmem:[#allocation2] sm:$0xff] %vm1632, %v1630
    %1634 = vst.msk [vmem:[#allocation2 + $0x8] sm:$0xff] %vm1632, %v1631
    // Predicated region
    $region10: #{attention_pallas.1} parent=1 // pred_check
      _
    $region11: #{attention_pallas.1} parent=1 // pred_check_branch
      %1636 = sbr.rel (0) target = $region13
    $region12: #{attention_pallas.1} parent=1 // pred_region
      %s1638 = ssub.s32 256, 256
      %1639 = vsyncadd [#allocation3], %s1638
      %s1640 = sshll.u32 [#allocation2], 4
      %s1641 = int_to_ptr.vmem [resolvable:$true] %s1640
      %1646 = dma.vmem_to_hbm [thread:$0]  %s1641, 256, %s2, [#allocation3], 128, 128, 8
    $region13: #{attention_pallas.1} parent=1 // pred_fallthru
      _
    // Predicated region
    $region14: #{attention_pallas.1} parent=1 // pred_check
      _
    $region15: #{attention_pallas.1} parent=1 // pred_check_branch
      %1648 = sbr.rel (0) target = $region17
    $region16: #{attention_pallas.1} parent=1 // pred_region
      %1649 = dma.done [#allocation3], 256
    $region17: #{attention_pallas.1} parent=1 // pred_fallthru
      _
    %1650 = vsyncpa [#allocation3], 1

</llo_original>
